<compile_context>
chip_gen: v5e
topology: v5e:2x2
jax: 0.10.0
libtpu: 0.0.40
codegen_flags: <defaults>
</compile_context>

<pallas_src>
import functools

import numpy as np
import jax
import jax.numpy as jnp
from jax.experimental import pallas as pl
from jax.experimental.pallas import tpu as pltpu


def fm_kernel(idxT_ref, tabT_ref, outT_ref):
    # idxT_ref: (F, TB)    int32 -- global embedding rows, batch on the lane axis
    # tabT_ref: (2D, Np)   f32   -- [E^T ; (W + bias/F - 0.5*E^2)^T], VMEM-resident
    # outT_ref: (D, TB)    f32   -- lane-dense output tile
    F, TB = idxT_ref.shape
    two_d, Np = tabT_ref.shape
    D = two_d // 2

    # One-hot "counts" matrix: counts[n, b] = #{f : idx[b, f] == n}.
    # F unrolled VPU compare/adds on dense (Np, TB) tiles, accumulated in int32,
    # converted to f32 once.
    row_ids = jax.lax.broadcasted_iota(jnp.int32, (Np, TB), 0)
    counts_i = jnp.zeros((Np, TB), jnp.int32)
    for f in range(F):                                   # F is small & static
        counts_i = counts_i + (row_ids == idxT_ref[f:f + 1, :]).astype(jnp.int32)
    counts = counts_i.astype(jnp.float32)

    # Single fused MXU matmul: top D rows -> s = (sum_f E[idx])^T,
    # bottom D rows -> r = (lin + bias - 0.5 * sum_f E[idx]^2)^T.
    sr = jnp.dot(tabT_ref[...], counts,
                 preferred_element_type=jnp.float32,
                 precision=jax.lax.Precision.HIGHEST)    # (2D, TB)
    s = sr[:D, :]
    r = sr[D:, :]

    # out = lin + bias + 0.5 * ((sum_f E)^2 - sum_f E^2)
    outT_ref[...] = 0.5 * s * s + r


@functools.partial(jax.jit, static_argnames=("block_b",))
def fm_forward(x_idx, emb_table, fc_table, bias, offsets, *, block_b=None):
    """FactorizationMachineModel forward.  x_idx: (B, F) int32 categorical ids."""
    B, F = x_idx.shape
    N, D = emb_table.shape

    # Default batch tile: ~2 grid steps (keeps both v7x TensorCores busy via the
    # "parallel" grid axis) but never below 128 lanes or above 1024.
    if block_b is None:
        tb = -(-(-(-B // 2)) // 128) * 128               # round_up(ceil(B/2), 128)
        tb = max(128, min(1024, tb))
    else:
        tb = block_b
    assert tb % 128 == 0, "batch tile must be a multiple of 128 lanes"

    # ---- parameter prep (tiny, parameter-only) ----
    # T1 = E ; T2 = W + bias/F - 0.5 * E^2   (bias fold exact: sum_n counts == F)
    t2 = (fc_table + bias / F) - 0.5 * emb_table * emb_table        # (N, D)
    tabT = jnp.concatenate([emb_table.T, t2.T], axis=0)             # (2D, N)
    n_pad = -(-N // 8) * 8                 # pad contraction dim to a sublane multiple
    if n_pad != N:
        tabT = jnp.pad(tabT, ((0, 0), (0, n_pad - N)))

    # ---- activations: add offsets, transpose so the batch sits on lanes ----
    idxT = (x_idx.astype(jnp.int32) + offsets[None, :]).T           # (F, B)
    b_pad = -(-B // tb) * tb
    if b_pad != B:
        idxT = jnp.pad(idxT, ((0, 0), (0, b_pad - B)))              # pad cols -> row 0

    outT = pl.pallas_call(
        fm_kernel,
        out_shape=jax.ShapeDtypeStruct((D, b_pad), jnp.float32),
        grid=(b_pad // tb,),
        in_specs=[
            pl.BlockSpec((F, tb), lambda i: (0, i)),        # idx^T, batch-tiled stream
            pl.BlockSpec((2 * D, n_pad), lambda i: (0, 0)),  # fused table (resident)
        ],
        out_specs=pl.BlockSpec((D, tb), lambda i: (0, i)),  # lane-dense output tile
        compiler_params=pltpu.CompilerParams(
            dimension_semantics=("parallel",)),             # shard grid over v7x's 2 TCs
    )(idxT, tabT)

    out = outT[:, :B].T                                     # (B, D)
    if D == 1:                                              # torch .squeeze(1)
        out = out[:, 0]
    return out


if __name__ == "__main__":
    # ---- deterministic config / parameters ----
    field_dims = np.array([13, 10, 7, 20], dtype=np.int32)   # 4 fields
    num_embeddings = int(field_dims.sum())                   # 50
    embed_dim = 16
    batch = 1000                                             # exercises padding + a 2-step grid

    offsets = jnp.asarray(
        np.array((0, *np.cumsum(field_dims)[:-1]), dtype=np.int32))

    key = jax.random.PRNGKey(0)
    k_emb, k_fc, k_x = jax.random.split(key, 3)

    # FeaturesEmbedding: xavier_uniform_ on (num_embeddings, embed_dim)
    bound = float(np.sqrt(6.0 / (num_embeddings + embed_dim)))
    emb_table = jax.random.uniform(
        k_emb, (num_embeddings, embed_dim),
        dtype=jnp.float32, minval=-bound, maxval=bound)

    # FeaturesLinear: nn.Embedding default init N(0, 1), output_dim=1.
    # The module inits bias to zeros; use a nonzero value here to exercise the
    # folded-bias path in the kernel.
    fc_table = jax.random.normal(k_fc, (num_embeddings, 1), dtype=jnp.float32)
    bias = jnp.full((1,), 0.25, dtype=jnp.float32)

    # Per-field categorical indices in [0, field_dims[f]).
    cols = []
    for f, kf in enumerate(jax.random.split(k_x, len(field_dims))):
        cols.append(jax.random.randint(kf, (batch, 1), 0, int(field_dims[f]),
                                       dtype=jnp.int32))
    x_idx = jnp.concatenate(cols, axis=1)                    # (B, F)

    out = fm_forward(x_idx, emb_table, fc_table, bias, offsets)
    out = jax.block_until_ready(out)

    # Pure-JAX reference (same math as the PyTorch module).
    idx = x_idx + offsets[None, :]
    e = jnp.take(emb_table, idx, axis=0)                                 # (B, F, D)
    lin_ref = jnp.sum(jnp.take(fc_table, idx, axis=0), axis=1) + bias    # (B, 1)
    fm_ref = 0.5 * (jnp.sum(e, axis=1) ** 2 - jnp.sum(e ** 2, axis=1))   # (B, D)
    ref = lin_ref + fm_ref

    assert out.shape == (batch, embed_dim), out.shape
    np.testing.assert_allclose(np.asarray(out), np.asarray(ref), rtol=1e-5, atol=1e-5)

    print("KERNEL_OK")
</pallas_src>

<mosaic_0001>
module attributes {stable_mosaic.version = 11 : i64} {
  func.func @fm_kernel(%arg0: i32, %arg1: memref<4x512xi32, #tpu.memory_space<vmem>>, %arg2: memref<32x56xf32, #tpu.memory_space<vmem>>, %arg3: memref<16x512xf32, #tpu.memory_space<vmem>>) attributes {dimension_semantics = [#tpu.dimension_semantics<parallel>], iteration_bounds = array<i64: 2>, scalar_prefetch = 0 : i64, scratch_operands = 0 : i64, tpu.core_type = #tpu.core_type<tc>, window_params = [{transform_indices = @transform_0, window_bounds = array<i64: 4, 512>}, {pipeline_mode = #tpu.pipeline_mode<synchronous>, transform_indices = @transform_1, window_bounds = array<i64: 32, 56>}, {transform_indices = @transform_2, window_bounds = array<i64: 16, 512>}]} {
    %0 = tpu.iota {dimensions = array<i32: 0>} : vector<56x512xi32>
    %c0_i32 = arith.constant 0 : i32
    %1 = vector.broadcast %c0_i32 : i32 to vector<56x512xi32>
    %c0 = arith.constant 0 : index
    %c0_0 = arith.constant 0 : index
    %2 = vector.load %arg1[%c0, %c0_0] : memref<4x512xi32, #tpu.memory_space<vmem>>, vector<1x512xi32>
    %3 = vector.broadcast %2 : vector<1x512xi32> to vector<56x512xi32>
    %4 = arith.cmpi eq, %0, %3 : vector<56x512xi32>
    %5 = arith.extui %4 : vector<56x512xi1> to vector<56x512xi32>
    %6 = arith.addi %1, %5 : vector<56x512xi32>
    %c1 = arith.constant 1 : index
    %c0_1 = arith.constant 0 : index
    %7 = vector.load %arg1[%c1, %c0_1] : memref<4x512xi32, #tpu.memory_space<vmem>>, vector<1x512xi32>
    %8 = vector.broadcast %7 : vector<1x512xi32> to vector<56x512xi32>
    %9 = arith.cmpi eq, %0, %8 : vector<56x512xi32>
    %10 = arith.extui %9 : vector<56x512xi1> to vector<56x512xi32>
    %11 = arith.addi %6, %10 : vector<56x512xi32>
    %c2 = arith.constant 2 : index
    %c0_2 = arith.constant 0 : index
    %12 = vector.load %arg1[%c2, %c0_2] : memref<4x512xi32, #tpu.memory_space<vmem>>, vector<1x512xi32>
    %13 = vector.broadcast %12 : vector<1x512xi32> to vector<56x512xi32>
    %14 = arith.cmpi eq, %0, %13 : vector<56x512xi32>
    %15 = arith.extui %14 : vector<56x512xi1> to vector<56x512xi32>
    %16 = arith.addi %11, %15 : vector<56x512xi32>
    %c3 = arith.constant 3 : index
    %c0_3 = arith.constant 0 : index
    %17 = vector.load %arg1[%c3, %c0_3] : memref<4x512xi32, #tpu.memory_space<vmem>>, vector<1x512xi32>
    %18 = vector.broadcast %17 : vector<1x512xi32> to vector<56x512xi32>
    %19 = arith.cmpi eq, %0, %18 : vector<56x512xi32>
    %20 = arith.extui %19 : vector<56x512xi1> to vector<56x512xi32>
    %21 = arith.addi %16, %20 : vector<56x512xi32>
    %22 = arith.sitofp %21 : vector<56x512xi32> to vector<56x512xf32>
    %c0_4 = arith.constant 0 : index
    %c0_5 = arith.constant 0 : index
    %23 = vector.load %arg2[%c0_4, %c0_5] : memref<32x56xf32, #tpu.memory_space<vmem>>, vector<32x56xf32>
    %cst = arith.constant dense<0.000000e+00> : vector<32x512xf32>
    %24 = tpu.matmul %23, %22, %cst {dimension_numbers = #tpu.dot_dimension_numbers<[1], [0], [0], [1], [0, 0, 1, 1], [], []>, precision = #tpu.contract_precision<fp32>} : vector<32x56xf32>, vector<56x512xf32>, vector<32x512xf32> -> vector<32x512xf32>
    %25 = vector.extract_strided_slice %24 {offsets = [0, 0], sizes = [16, 512], strides = [1, 1]} : vector<32x512xf32> to vector<16x512xf32>
    %26 = vector.extract_strided_slice %24 {offsets = [16, 0], sizes = [16, 512], strides = [1, 1]} : vector<32x512xf32> to vector<16x512xf32>
    %cst_6 = arith.constant 5.000000e-01 : f32
    %27 = vector.broadcast %cst_6 : f32 to vector<16x512xf32>
    %28 = arith.mulf %27, %25 : vector<16x512xf32>
    %29 = arith.mulf %28, %25 : vector<16x512xf32>
    %30 = arith.addf %29, %26 : vector<16x512xf32>
    %c0_7 = arith.constant 0 : index
    %c0_8 = arith.constant 0 : index
    %31 = vector.load %arg3[%c0_7, %c0_8] : memref<16x512xf32, #tpu.memory_space<vmem>>, vector<16x512xf32>
    tpu.vector_store %arg3[%c0_7, %c0_8], %30 {strides = array<i32>} : memref<16x512xf32, #tpu.memory_space<vmem>>, vector<16x512xf32>,
    return
  }
  func.func @transform_0(%arg0: i32) -> (i32, i32) {
    %c0_i32 = arith.constant 0 : i32
    %c0_i32_0 = arith.constant 0 : i32
    return %c0_i32, %arg0 : i32, i32
  }
  func.func @transform_1(%arg0: i32) -> (i32, i32) {
    %c0_i32 = arith.constant 0 : i32
    %c0_i32_0 = arith.constant 0 : i32
    %c0_i32_1 = arith.constant 0 : i32
    return %c0_i32, %c0_i32_0 : i32, i32
  }
  func.func @transform_2(%arg0: i32) -> (i32, i32) {
    %c0_i32 = arith.constant 0 : i32
    %c0_i32_0 = arith.constant 0 : i32
    return %c0_i32, %arg0 : i32, i32
  }
}

</mosaic_0001>

<llo_original>
// kernel: fm_forward.1
$region0: #{fm_forward.1}
  #allocation0 [shape = 'u32[]', space=smem, size = 0x4, offset = 0x4, fixed_abs, tag = 'smem constant byte address 0x4 - core index']
  #allocation1 [shape = 'u32[72,128]{1,0:T(1,128)}', space=vmem, size = 0x9000, scoped, tag = 'internal scratch']
  %s0 = inlined_call_operand.vmem [shape: s32[4,1024], index: 0, kind: input, shape index: {}]
  %s1 = inlined_call_operand.vmem [shape: f32[32,56], index: 1, kind: input, shape index: {}]
  %s2 = inlined_call_operand.vmem [shape: f32[16,1024], index: 2, kind: output, shape index: {}]
  %s3 = sld [smem:[#allocation0]]
  $region60: #{fm_forward.1} parent=0
    _
  %s5 = ssub.s32 1, %s3
  %s6 = scalar_select 0, %s5, %s3
  $region1: #{fm_forward.1} parent=0
    #allocation2 [shape = 'u8[65536]{0}', space=vmem, size = 0x10000, scoped, tag = 'output window, operand 0']
    loop: start=0, step=1, limit=4
    $region2: #{fm_forward.1} parent=1 // loop_pre_header
      _
    $region3: #{fm_forward.1} parent=1 // loop_header
      %s8 = sphi 0, %s12
      %p9 = scmp.ge.s32.totalorder %s8, 4
      %s18 = sphi 0, %s20
      %s21 = sphi 0, %s18
      %s22 = sphi 0, %s21
      %s38 = sphi 0, %s22
      %s42 = sphi 0, %s42
      %s44 = sphi 0, %s42
      %s45 = sphi 0, %s44
      %s59 = sphi 0, %s45
      %s65 = sphi 0, %s67
      %s68 = sphi 0, %s65
      %s69 = sphi 0, %s68
      %s85 = sphi 0, %s69
    $region4: #{fm_forward.1} parent=1 // loop_header_branch
      %11 = sbr.rel (%p9) target = $region8
    $region5: #{fm_forward.1} parent=1 // loop_body
      %s13 = ssub.s32 %s8, 1
      %s14 = ssub.s32 %s8, 2
      %s15 = sadd.s32 %s8, 1
      %s16 = ssub.s32 %s8, %s15
      %p17 = scmp.eq.s32.totalorder %s16, 0
      %s19 = sadd.s32 %s18, 1
      %s20 = scalar_select %p17, %s18, %s19
      %p23 = pneg %p17
      %p24 = scmp.eq.s32.totalorder %s8, 1
      %p25 = por %p23, %p24
      %p26 = scmp.ne.s32.totalorder %s18, %s21
      %p27 = scmp.eq.s32.totalorder %s8, 0
      %p28 = por %p26, %p27
      %p29 = scmp.ne.s32.totalorder %s18, %s21
      %p30 = scmp.eq.s32.totalorder %s13, 1
      %p31 = por %p29, %p30
      %p32 = scmp.ne.s32.totalorder %s21, %s22
      %p33 = scmp.eq.s32.totalorder %s13, 0
      %p34 = por %p32, %p33
      %p35 = scmp.ne.s32.totalorder %s21, %s22
      %p36 = scmp.eq.s32.totalorder %s14, 1
      %p37 = por %p35, %p36
      %p39 = scmp.ne.s32.totalorder %s22, %s38
      %p40 = scmp.eq.s32.totalorder %s14, 0
      %p41 = por %p39, %p40
      %s43 = sadd.s32 %s42, 1
      %p46 = scmp.eq.s32.totalorder %s8, 1
      %p47 = scmp.ne.s32.totalorder %s42, %s44
      %p48 = scmp.eq.s32.totalorder %s8, 0
      %p49 = por %p47, %p48
      %p50 = scmp.ne.s32.totalorder %s42, %s44
      %p51 = scmp.eq.s32.totalorder %s13, 1
      %p52 = por %p50, %p51
      %p53 = scmp.ne.s32.totalorder %s44, %s45
      %p54 = scmp.eq.s32.totalorder %s13, 0
      %p55 = por %p53, %p54
      %p56 = scmp.ne.s32.totalorder %s44, %s45
      %p57 = scmp.eq.s32.totalorder %s14, 1
      %p58 = por %p56, %p57
      %p60 = scmp.ne.s32.totalorder %s45, %s59
      %p61 = scmp.eq.s32.totalorder %s14, 0
      %p62 = por %p60, %p61
      %s63 = ssub.s32 %s8, %s15
      %p64 = scmp.eq.s32.totalorder %s63, 0
      %s66 = sadd.s32 %s65, 1
      %s67 = scalar_select %p64, %s65, %s66
      %p70 = pneg %p64
      %p71 = scmp.eq.s32.totalorder %s8, 1
      %p72 = por %p70, %p71
      %p73 = scmp.ne.s32.totalorder %s65, %s68
      %p74 = scmp.eq.s32.totalorder %s8, 0
      %p75 = por %p73, %p74
      %p76 = scmp.ne.s32.totalorder %s65, %s68
      %p77 = scmp.eq.s32.totalorder %s13, 1
      %p78 = por %p76, %p77
      %p79 = scmp.ne.s32.totalorder %s68, %s69
      %p80 = scmp.eq.s32.totalorder %s13, 0
      %p81 = por %p79, %p80
      %p82 = scmp.ne.s32.totalorder %s68, %s69
      %p83 = scmp.eq.s32.totalorder %s14, 1
      %p84 = por %p82, %p83
      %p86 = scmp.ne.s32.totalorder %s69, %s85
      %p87 = scmp.eq.s32.totalorder %s14, 0
      %p88 = por %p86, %p87
      %p89 = scmp.le.s32.totalorder 1, %s8
      %p90 = scmp.lt.s32.totalorder %s8, 3
      %p91 = pnand %p89, %p90
      %p92 = pneg %p91
      // Predicated region
      $region9: #{fm_forward.1} parent=5 // pred_check
        _
      $region10: #{fm_forward.1} parent=5 // pred_check_branch
        %94 = sbr.rel (%p91) target = $region12
      $region11: #{fm_forward.1} parent=5 // pred_region
        %s95 = ssub.s32 %s8, 1
        // Predicated region
        $region13: #{fm_forward.1} parent=11 // pred_check
          %p96 = pneg %p55
        $region14: #{fm_forward.1} parent=11 // pred_check_branch
          %98 = sbr.rel (%p96) target = $region16
        $region15: #{fm_forward.1} parent=11 // pred_region
          _
        $region16: #{fm_forward.1} parent=11 // pred_fallthru
          _
      $region12: #{fm_forward.1} parent=5 // pred_fallthru
        _
      %p99 = scmp.lt.s32.totalorder %s8, 2
      // Predicated region
      $region17: #{fm_forward.1} parent=5 // pred_check
        %p100 = pneg %p99
      $region18: #{fm_forward.1} parent=5 // pred_check_branch
        %102 = sbr.rel (%p100) target = $region20
      $region19: #{fm_forward.1} parent=5 // pred_region
        // Predicated region
        $region21: #{fm_forward.1} parent=19 // pred_check
          %p103 = pneg %p28
        $region22: #{fm_forward.1} parent=19 // pred_check_branch
          %105 = sbr.rel (%p103) target = $region24
        $region23: #{fm_forward.1} parent=19 // pred_region
          %s106 = smul.u32 4, %s8
          %p107 = scmp.lt.s32.totalorder %s106, 7
          %s108 = scalar_select %p107, %s106, 7
          %s109 = smul.addr %s108, 4
          %s110 = scalar_lea.vmem %s0, %s109
          %s111 = smul.u32 4, %s8
        $region24: #{fm_forward.1} parent=19 // pred_fallthru
          _
      $region20: #{fm_forward.1} parent=5 // pred_fallthru
        _
      %p112 = scmp.le.s32.totalorder 1, %s8
      %p113 = scmp.lt.s32.totalorder %s8, 3
      %p114 = pnand %p112, %p113
      %p115 = pneg %p114
      // Predicated region
      $region25: #{fm_forward.1} parent=5 // pred_check
        _
      $region26: #{fm_forward.1} parent=5 // pred_check_branch
        %117 = sbr.rel (%p114) target = $region28
      $region27: #{fm_forward.1} parent=5 // pred_region
        %s118 = ssub.s32 %s8, 1
        %s119 = smul.u32 4, %s13
        %p120 = scmp.lt.s32.totalorder %s119, 7
        %s121 = scalar_select %p120, %s119, 7
        %s122 = smul.addr %s121, 4
        %s123 = scalar_lea.vmem %s0, %s122
        %p124 = pneg %p34
        %p125 = pneg %p31
        %p126 = pneg %p55
        %p127 = pneg %p52
        %p128 = pneg %p81
        %p129 = pneg %p78
        %s130 = sand.u32 %s68, 1
        %s131 = sand.u32 %s68, 1
        %s132 = smul.addr %s131, 64
        %s133 = scalar_lea.vmem [#allocation2], %s132
        %s134 = smul.u32 4, %s13
        %p135 = scmp.lt.s32.totalorder %s134, 7
        %s136 = scalar_select %p135, %s134, 7
        %s137 = smul.addr %s136, 4
        %s138 = scalar_lea.vmem %s0, %s137
        %s139 = smul.u32 4, %s13
        %s140 = smul.u32 4, %s13
        %v141 = vlaneseq
        %v142 = vshrl.u32 %v141, 7
        %v143 = vadd.s32 %v142, 8
        %v144 = vadd.s32 %v142, 16
        %v145 = vadd.s32 %v142, 24
        %v146 = vadd.s32 %v142, 32
        %v147 = vadd.s32 %v142, 40
        %v148 = vadd.s32 %v142, 48
        %v149 = vld [vmem:[%s138] ss:$4 sm:$0xf]
        %v150 = vperm.slane %v149, 0
        %v151 = vperm.slane %v149, 1
        %v152 = vperm.slane %v149, 2
        %v153 = vperm.slane %v149, 3
        %vm154 = vcmp.eq.s32.totalorder %v142, %v150
        %vm155 = vcmp.eq.s32.totalorder %v142, %v151
        %vm156 = vcmp.eq.s32.totalorder %v142, %v152
        %vm157 = vcmp.eq.s32.totalorder %v142, %v153
        %vm158 = vcmp.eq.s32.totalorder %v143, %v150
        %vm159 = vcmp.eq.s32.totalorder %v143, %v151
        %vm160 = vcmp.eq.s32.totalorder %v143, %v152
        %vm161 = vcmp.eq.s32.totalorder %v143, %v153
        %vm162 = vcmp.eq.s32.totalorder %v144, %v150
        %vm163 = vcmp.eq.s32.totalorder %v144, %v151
        %vm164 = vcmp.eq.s32.totalorder %v144, %v152
        %vm165 = vcmp.eq.s32.totalorder %v144, %v153
        %vm166 = vcmp.eq.s32.totalorder %v145, %v150
        %vm167 = vcmp.eq.s32.totalorder %v145, %v151
        %vm168 = vcmp.eq.s32.totalorder %v145, %v152
        %vm169 = vcmp.eq.s32.totalorder %v145, %v153
        %vm170 = vcmp.eq.s32.totalorder %v146, %v150
        %vm171 = vcmp.eq.s32.totalorder %v146, %v151
        %vm172 = vcmp.eq.s32.totalorder %v146, %v152
        %vm173 = vcmp.eq.s32.totalorder %v146, %v153
        %vm174 = vcmp.eq.s32.totalorder %v147, %v150
        %vm175 = vcmp.eq.s32.totalorder %v147, %v151
        %vm176 = vcmp.eq.s32.totalorder %v147, %v152
        %vm177 = vcmp.eq.s32.totalorder %v147, %v153
        %vm178 = vcmp.eq.s32.totalorder %v148, %v150
        %vm179 = vcmp.eq.s32.totalorder %v148, %v151
        %vm180 = vcmp.eq.s32.totalorder %v148, %v152
        %vm181 = vcmp.eq.s32.totalorder %v148, %v153
        %v182 = vsel %vm154, 1, 0
        %v183 = vsel %vm155, 1, 0
        %v184 = vsel %vm156, 1, 0
        %v185 = vsel %vm157, 1, 0
        %v186 = vsel %vm158, 1, 0
        %v187 = vsel %vm159, 1, 0
        %v188 = vsel %vm160, 1, 0
        %v189 = vsel %vm161, 1, 0
        %v190 = vsel %vm162, 1, 0
        %v191 = vsel %vm163, 1, 0
        %v192 = vsel %vm164, 1, 0
        %v193 = vsel %vm165, 1, 0
        %v194 = vsel %vm166, 1, 0
        %v195 = vsel %vm167, 1, 0
        %v196 = vsel %vm168, 1, 0
        %v197 = vsel %vm169, 1, 0
        %v198 = vsel %vm170, 1, 0
        %v199 = vsel %vm171, 1, 0
        %v200 = vsel %vm172, 1, 0
        %v201 = vsel %vm173, 1, 0
        %v202 = vsel %vm174, 1, 0
        %v203 = vsel %vm175, 1, 0
        %v204 = vsel %vm176, 1, 0
        %v205 = vsel %vm177, 1, 0
        %v206 = vsel %vm178, 1, 0
        %v207 = vsel %vm179, 1, 0
        %v208 = vsel %vm180, 1, 0
        %v209 = vsel %vm181, 1, 0
        %s210 = scalar_lea.vmem %s138, 1
        %v211 = vld [vmem:[%s210] ss:$4 sm:$0xf]
        %v212 = vperm.slane %v211, 0
        %v213 = vperm.slane %v211, 1
        %v214 = vperm.slane %v211, 2
        %v215 = vperm.slane %v211, 3
        %vm216 = vcmp.eq.s32.totalorder %v142, %v212
        %vm217 = vcmp.eq.s32.totalorder %v142, %v213
        %vm218 = vcmp.eq.s32.totalorder %v142, %v214
        %vm219 = vcmp.eq.s32.totalorder %v142, %v215
        %vm220 = vcmp.eq.s32.totalorder %v143, %v212
        %vm221 = vcmp.eq.s32.totalorder %v143, %v213
        %vm222 = vcmp.eq.s32.totalorder %v143, %v214
        %vm223 = vcmp.eq.s32.totalorder %v143, %v215
        %vm224 = vcmp.eq.s32.totalorder %v144, %v212
        %vm225 = vcmp.eq.s32.totalorder %v144, %v213
        %vm226 = vcmp.eq.s32.totalorder %v144, %v214
        %vm227 = vcmp.eq.s32.totalorder %v144, %v215
        %vm228 = vcmp.eq.s32.totalorder %v145, %v212
        %vm229 = vcmp.eq.s32.totalorder %v145, %v213
        %vm230 = vcmp.eq.s32.totalorder %v145, %v214
        %vm231 = vcmp.eq.s32.totalorder %v145, %v215
        %vm232 = vcmp.eq.s32.totalorder %v146, %v212
        %vm233 = vcmp.eq.s32.totalorder %v146, %v213
        %vm234 = vcmp.eq.s32.totalorder %v146, %v214
        %vm235 = vcmp.eq.s32.totalorder %v146, %v215
        %vm236 = vcmp.eq.s32.totalorder %v147, %v212
        %vm237 = vcmp.eq.s32.totalorder %v147, %v213
        %vm238 = vcmp.eq.s32.totalorder %v147, %v214
        %vm239 = vcmp.eq.s32.totalorder %v147, %v215
        %vm240 = vcmp.eq.s32.totalorder %v148, %v212
        %vm241 = vcmp.eq.s32.totalorder %v148, %v213
        %vm242 = vcmp.eq.s32.totalorder %v148, %v214
        %vm243 = vcmp.eq.s32.totalorder %v148, %v215
        %v244 = vsel %vm216, 1, 0
        %v245 = vsel %vm217, 1, 0
        %v246 = vsel %vm218, 1, 0
        %v247 = vsel %vm219, 1, 0
        %v248 = vsel %vm220, 1, 0
        %v249 = vsel %vm221, 1, 0
        %v250 = vsel %vm222, 1, 0
        %v251 = vsel %vm223, 1, 0
        %v252 = vsel %vm224, 1, 0
        %v253 = vsel %vm225, 1, 0
        %v254 = vsel %vm226, 1, 0
        %v255 = vsel %vm227, 1, 0
        %v256 = vsel %vm228, 1, 0
        %v257 = vsel %vm229, 1, 0
        %v258 = vsel %vm230, 1, 0
        %v259 = vsel %vm231, 1, 0
        %v260 = vsel %vm232, 1, 0
        %v261 = vsel %vm233, 1, 0
        %v262 = vsel %vm234, 1, 0
        %v263 = vsel %vm235, 1, 0
        %v264 = vsel %vm236, 1, 0
        %v265 = vsel %vm237, 1, 0
        %v266 = vsel %vm238, 1, 0
        %v267 = vsel %vm239, 1, 0
        %v268 = vsel %vm240, 1, 0
        %v269 = vsel %vm241, 1, 0
        %v270 = vsel %vm242, 1, 0
        %v271 = vsel %vm243, 1, 0
        %v272 = vadd.s32 %v182, %v244
        %v273 = vadd.s32 %v183, %v245
        %v274 = vadd.s32 %v184, %v246
        %v275 = vadd.s32 %v185, %v247
        %v276 = vadd.s32 %v186, %v248
        %v277 = vadd.s32 %v187, %v249
        %v278 = vadd.s32 %v188, %v250
        %v279 = vadd.s32 %v189, %v251
        %v280 = vadd.s32 %v190, %v252
        %v281 = vadd.s32 %v191, %v253
        %v282 = vadd.s32 %v192, %v254
        %v283 = vadd.s32 %v193, %v255
        %v284 = vadd.s32 %v194, %v256
        %v285 = vadd.s32 %v195, %v257
        %v286 = vadd.s32 %v196, %v258
        %v287 = vadd.s32 %v197, %v259
        %v288 = vadd.s32 %v198, %v260
        %v289 = vadd.s32 %v199, %v261
        %v290 = vadd.s32 %v200, %v262
        %v291 = vadd.s32 %v201, %v263
        %v292 = vadd.s32 %v202, %v264
        %v293 = vadd.s32 %v203, %v265
        %v294 = vadd.s32 %v204, %v266
        %v295 = vadd.s32 %v205, %v267
        %v296 = vadd.s32 %v206, %v268
        %v297 = vadd.s32 %v207, %v269
        %v298 = vadd.s32 %v208, %v270
        %v299 = vadd.s32 %v209, %v271
        %s300 = scalar_lea.vmem %s138, 2
        %v301 = vld [vmem:[%s300] ss:$4 sm:$0xf]
        %v302 = vperm.slane %v301, 0
        %v303 = vperm.slane %v301, 1
        %v304 = vperm.slane %v301, 2
        %v305 = vperm.slane %v301, 3
        %vm306 = vcmp.eq.s32.totalorder %v142, %v302
        %vm307 = vcmp.eq.s32.totalorder %v142, %v303
        %vm308 = vcmp.eq.s32.totalorder %v142, %v304
        %vm309 = vcmp.eq.s32.totalorder %v142, %v305
        %vm310 = vcmp.eq.s32.totalorder %v143, %v302
        %vm311 = vcmp.eq.s32.totalorder %v143, %v303
        %vm312 = vcmp.eq.s32.totalorder %v143, %v304
        %vm313 = vcmp.eq.s32.totalorder %v143, %v305
        %vm314 = vcmp.eq.s32.totalorder %v144, %v302
        %vm315 = vcmp.eq.s32.totalorder %v144, %v303
        %vm316 = vcmp.eq.s32.totalorder %v144, %v304
        %vm317 = vcmp.eq.s32.totalorder %v144, %v305
        %vm318 = vcmp.eq.s32.totalorder %v145, %v302
        %vm319 = vcmp.eq.s32.totalorder %v145, %v303
        %vm320 = vcmp.eq.s32.totalorder %v145, %v304
        %vm321 = vcmp.eq.s32.totalorder %v145, %v305
        %vm322 = vcmp.eq.s32.totalorder %v146, %v302
        %vm323 = vcmp.eq.s32.totalorder %v146, %v303
        %vm324 = vcmp.eq.s32.totalorder %v146, %v304
        %vm325 = vcmp.eq.s32.totalorder %v146, %v305
        %vm326 = vcmp.eq.s32.totalorder %v147, %v302
        %vm327 = vcmp.eq.s32.totalorder %v147, %v303
        %vm328 = vcmp.eq.s32.totalorder %v147, %v304
        %vm329 = vcmp.eq.s32.totalorder %v147, %v305
        %vm330 = vcmp.eq.s32.totalorder %v148, %v302
        %vm331 = vcmp.eq.s32.totalorder %v148, %v303
        %vm332 = vcmp.eq.s32.totalorder %v148, %v304
        %vm333 = vcmp.eq.s32.totalorder %v148, %v305
        %v334 = vsel %vm306, 1, 0
        %v335 = vsel %vm307, 1, 0
        %v336 = vsel %vm308, 1, 0
        %v337 = vsel %vm309, 1, 0
        %v338 = vsel %vm310, 1, 0
        %v339 = vsel %vm311, 1, 0
        %v340 = vsel %vm312, 1, 0
        %v341 = vsel %vm313, 1, 0
        %v342 = vsel %vm314, 1, 0
        %v343 = vsel %vm315, 1, 0
        %v344 = vsel %vm316, 1, 0
        %v345 = vsel %vm317, 1, 0
        %v346 = vsel %vm318, 1, 0
        %v347 = vsel %vm319, 1, 0
        %v348 = vsel %vm320, 1, 0
        %v349 = vsel %vm321, 1, 0
        %v350 = vsel %vm322, 1, 0
        %v351 = vsel %vm323, 1, 0
        %v352 = vsel %vm324, 1, 0
        %v353 = vsel %vm325, 1, 0
        %v354 = vsel %vm326, 1, 0
        %v355 = vsel %vm327, 1, 0
        %v356 = vsel %vm328, 1, 0
        %v357 = vsel %vm329, 1, 0
        %v358 = vsel %vm330, 1, 0
        %v359 = vsel %vm331, 1, 0
        %v360 = vsel %vm332, 1, 0
        %v361 = vsel %vm333, 1, 0
        %v362 = vadd.s32 %v272, %v334
        %v363 = vadd.s32 %v273, %v335
        %v364 = vadd.s32 %v274, %v336
        %v365 = vadd.s32 %v275, %v337
        %v366 = vadd.s32 %v276, %v338
        %v367 = vadd.s32 %v277, %v339
        %v368 = vadd.s32 %v278, %v340
        %v369 = vadd.s32 %v279, %v341
        %v370 = vadd.s32 %v280, %v342
        %v371 = vadd.s32 %v281, %v343
        %v372 = vadd.s32 %v282, %v344
        %v373 = vadd.s32 %v283, %v345
        %v374 = vadd.s32 %v284, %v346
        %v375 = vadd.s32 %v285, %v347
        %v376 = vadd.s32 %v286, %v348
        %v377 = vadd.s32 %v287, %v349
        %v378 = vadd.s32 %v288, %v350
        %v379 = vadd.s32 %v289, %v351
        %v380 = vadd.s32 %v290, %v352
        %v381 = vadd.s32 %v291, %v353
        %v382 = vadd.s32 %v292, %v354
        %v383 = vadd.s32 %v293, %v355
        %v384 = vadd.s32 %v294, %v356
        %v385 = vadd.s32 %v295, %v357
        %v386 = vadd.s32 %v296, %v358
        %v387 = vadd.s32 %v297, %v359
        %v388 = vadd.s32 %v298, %v360
        %v389 = vadd.s32 %v299, %v361
        %s390 = scalar_lea.vmem %s138, 3
        %v391 = vld [vmem:[%s390] ss:$4 sm:$0xf]
        %v392 = vperm.slane %v391, 0
        %v393 = vperm.slane %v391, 1
        %v394 = vperm.slane %v391, 2
        %v395 = vperm.slane %v391, 3
        %vm396 = vcmp.eq.s32.totalorder %v142, %v392
        %vm397 = vcmp.eq.s32.totalorder %v142, %v393
        %vm398 = vcmp.eq.s32.totalorder %v142, %v394
        %vm399 = vcmp.eq.s32.totalorder %v142, %v395
        %vm400 = vcmp.eq.s32.totalorder %v143, %v392
        %vm401 = vcmp.eq.s32.totalorder %v143, %v393
        %vm402 = vcmp.eq.s32.totalorder %v143, %v394
        %vm403 = vcmp.eq.s32.totalorder %v143, %v395
        %vm404 = vcmp.eq.s32.totalorder %v144, %v392
        %vm405 = vcmp.eq.s32.totalorder %v144, %v393
        %vm406 = vcmp.eq.s32.totalorder %v144, %v394
        %vm407 = vcmp.eq.s32.totalorder %v144, %v395
        %vm408 = vcmp.eq.s32.totalorder %v145, %v392
        %vm409 = vcmp.eq.s32.totalorder %v145, %v393
        %vm410 = vcmp.eq.s32.totalorder %v145, %v394
        %vm411 = vcmp.eq.s32.totalorder %v145, %v395
        %vm412 = vcmp.eq.s32.totalorder %v146, %v392
        %vm413 = vcmp.eq.s32.totalorder %v146, %v393
        %vm414 = vcmp.eq.s32.totalorder %v146, %v394
        %vm415 = vcmp.eq.s32.totalorder %v146, %v395
        %vm416 = vcmp.eq.s32.totalorder %v147, %v392
        %vm417 = vcmp.eq.s32.totalorder %v147, %v393
        %vm418 = vcmp.eq.s32.totalorder %v147, %v394
        %vm419 = vcmp.eq.s32.totalorder %v147, %v395
        %vm420 = vcmp.eq.s32.totalorder %v148, %v392
        %vm421 = vcmp.eq.s32.totalorder %v148, %v393
        %vm422 = vcmp.eq.s32.totalorder %v148, %v394
        %vm423 = vcmp.eq.s32.totalorder %v148, %v395
        %v424 = vsel %vm396, 1, 0
        %v425 = vsel %vm397, 1, 0
        %v426 = vsel %vm398, 1, 0
        %v427 = vsel %vm399, 1, 0
        %v428 = vsel %vm400, 1, 0
        %v429 = vsel %vm401, 1, 0
        %v430 = vsel %vm402, 1, 0
        %v431 = vsel %vm403, 1, 0
        %v432 = vsel %vm404, 1, 0
        %v433 = vsel %vm405, 1, 0
        %v434 = vsel %vm406, 1, 0
        %v435 = vsel %vm407, 1, 0
        %v436 = vsel %vm408, 1, 0
        %v437 = vsel %vm409, 1, 0
        %v438 = vsel %vm410, 1, 0
        %v439 = vsel %vm411, 1, 0
        %v440 = vsel %vm412, 1, 0
        %v441 = vsel %vm413, 1, 0
        %v442 = vsel %vm414, 1, 0
        %v443 = vsel %vm415, 1, 0
        %v444 = vsel %vm416, 1, 0
        %v445 = vsel %vm417, 1, 0
        %v446 = vsel %vm418, 1, 0
        %v447 = vsel %vm419, 1, 0
        %v448 = vsel %vm420, 1, 0
        %v449 = vsel %vm421, 1, 0
        %v450 = vsel %vm422, 1, 0
        %v451 = vsel %vm423, 1, 0
        %v452 = vadd.s32 %v362, %v424
        %v453 = vadd.s32 %v363, %v425
        %v454 = vadd.s32 %v364, %v426
        %v455 = vadd.s32 %v365, %v427
        %v456 = vadd.s32 %v366, %v428
        %v457 = vadd.s32 %v367, %v429
        %v458 = vadd.s32 %v368, %v430
        %v459 = vadd.s32 %v369, %v431
        %v460 = vadd.s32 %v370, %v432
        %v461 = vadd.s32 %v371, %v433
        %v462 = vadd.s32 %v372, %v434
        %v463 = vadd.s32 %v373, %v435
        %v464 = vadd.s32 %v374, %v436
        %v465 = vadd.s32 %v375, %v437
        %v466 = vadd.s32 %v376, %v438
        %v467 = vadd.s32 %v377, %v439
        %v468 = vadd.s32 %v378, %v440
        %v469 = vadd.s32 %v379, %v441
        %v470 = vadd.s32 %v380, %v442
        %v471 = vadd.s32 %v381, %v443
        %v472 = vadd.s32 %v382, %v444
        %v473 = vadd.s32 %v383, %v445
        %v474 = vadd.s32 %v384, %v446
        %v475 = vadd.s32 %v385, %v447
        %v476 = vadd.s32 %v386, %v448
        %v477 = vadd.s32 %v387, %v449
        %v478 = vadd.s32 %v388, %v450
        %v479 = vadd.s32 %v389, %v451
        %v480 = vcvt.s32.f32 %v452
        %v481 = vcvt.s32.f32 %v453
        %v482 = vcvt.s32.f32 %v454
        %v483 = vcvt.s32.f32 %v455
        %v484 = vcvt.s32.f32 %v456
        %v485 = vcvt.s32.f32 %v457
        %v486 = vcvt.s32.f32 %v458
        %v487 = vcvt.s32.f32 %v459
        %v488 = vcvt.s32.f32 %v460
        %v489 = vcvt.s32.f32 %v461
        %v490 = vcvt.s32.f32 %v462
        %v491 = vcvt.s32.f32 %v463
        %v492 = vcvt.s32.f32 %v464
        %v493 = vcvt.s32.f32 %v465
        %v494 = vcvt.s32.f32 %v466
        %v495 = vcvt.s32.f32 %v467
        %v496 = vcvt.s32.f32 %v468
        %v497 = vcvt.s32.f32 %v469
        %v498 = vcvt.s32.f32 %v470
        %v499 = vcvt.s32.f32 %v471
        %v500 = vcvt.s32.f32 %v472
        %v501 = vcvt.s32.f32 %v473
        %v502 = vcvt.s32.f32 %v474
        %v503 = vcvt.s32.f32 %v475
        %v504 = vcvt.s32.f32 %v476
        %v505 = vcvt.s32.f32 %v477
        %v506 = vcvt.s32.f32 %v478
        %v507 = vcvt.s32.f32 %v479
        %v508 = vld [vmem:[%s1] sm:$0xff]
        %v509 = vld [vmem:[%s1 + $0x8] sm:$0xff]
        %v510 = vld [vmem:[%s1 + $0x10] sm:$0xff]
        %v511 = vld [vmem:[%s1 + $0x18] sm:$0xff]
        %vm512 = vcmask 457728
        %v514 = vsel %vm512, %v508, 0
        %v517 = vsel %vm512, %v509, 0
        %v520 = vsel %vm512, %v510, 0
        %v523 = vsel %vm512, %v511, 0
        %525 = vmatpush.msra.mxu0 0.0
        %526 = vmatpush.msra.mxu0 0.0
        %527 = vmatpush.msra.mxu0 0.0
        %528 = vmatpush.msra.mxu0 0.0
        %529 = vmatpush.msra.mxu0 0.0
        %530 = vmatpush.msra.mxu0 0.0
        %531 = vmatpush.msra.mxu0 0.0
        %532 = vmatpush.msra.mxu0 0.0
        %533 = vmatpush.msra.mxu0 0.0
        %v534 = vand.u32 %v504, 4294901760
        %535 = vmatpush.msra.mxu0 %v534
        %v536 = vand.u32 %v500, 4294901760
        %537 = vmatpush.msra.mxu0 %v536
        %v538 = vand.u32 %v496, 4294901760
        %539 = vmatpush.msra.mxu0 %v538
        %v540 = vand.u32 %v492, 4294901760
        %541 = vmatpush.msra.mxu0 %v540
        %v542 = vand.u32 %v488, 4294901760
        %543 = vmatpush.msra.mxu0 %v542
        %v544 = vand.u32 %v484, 4294901760
        %545 = vmatpush.msra.mxu0 %v544
        %v546 = vand.u32 %v480, 4294901760
        %547 = vmatpush.msra.mxu0 %v546
        %v548 = vand.u32 %v514, 4294901760
        %v549 = vsub.f32 %v514, %v548
        %v550 = vand.u32 %v549, 4294901760
        %v551 = vsub.f32 %v549, %v550
        %v552 = vand.u32 %v551, 4294901760
        %553 = vmatmul.f32.gmra.mxu0 %v552
        %v554 = vpop.f32.mrf.mxu0
        %v555 = vadd.f32 0.0, %v554
        %v556 = vand.u32 %v517, 4294901760
        %v557 = vsub.f32 %v517, %v556
        %v558 = vand.u32 %v557, 4294901760
        %v559 = vsub.f32 %v557, %v558
        %v560 = vand.u32 %v559, 4294901760
        %561 = vmatmul.f32.gmra.mxu0 %v560
        %v562 = vpop.f32.mrf.mxu0
        %v563 = vadd.f32 0.0, %v562
        %v564 = vand.u32 %v520, 4294901760
        %v565 = vsub.f32 %v520, %v564
        %v566 = vand.u32 %v565, 4294901760
        %v567 = vsub.f32 %v565, %v566
        %v568 = vand.u32 %v567, 4294901760
        %569 = vmatmul.f32.gmra.mxu0 %v568
        %v570 = vpop.f32.mrf.mxu0
        %v571 = vadd.f32 0.0, %v570
        %v572 = vand.u32 %v523, 4294901760
        %v573 = vsub.f32 %v523, %v572
        %v574 = vand.u32 %v573, 4294901760
        %v575 = vsub.f32 %v573, %v574
        %v576 = vand.u32 %v575, 4294901760
        %577 = vmatmul.f32.gmra.mxu0 %v576
        %v578 = vpop.f32.mrf.mxu0
        %v579 = vadd.f32 0.0, %v578
        %580 = vdwg.mxu0
        %581 = vmatpush.msra.mxu0 0.0
        %582 = vmatpush.msra.mxu0 0.0
        %583 = vmatpush.msra.mxu0 0.0
        %584 = vmatpush.msra.mxu0 0.0
        %585 = vmatpush.msra.mxu0 0.0
        %586 = vmatpush.msra.mxu0 0.0
        %587 = vmatpush.msra.mxu0 0.0
        %588 = vmatpush.msra.mxu0 0.0
        %589 = vmatpush.msra.mxu0 0.0
        %v590 = vand.u32 %v504, 4294901760
        %v591 = vsub.f32 %v504, %v590
        %v592 = vand.u32 %v591, 4294901760
        %v593 = vsub.f32 %v591, %v592
        %v594 = vand.u32 %v593, 4294901760
        %595 = vmatpush.msra.mxu0 %v594
        %v596 = vand.u32 %v500, 4294901760
        %v597 = vsub.f32 %v500, %v596
        %v598 = vand.u32 %v597, 4294901760
        %v599 = vsub.f32 %v597, %v598
        %v600 = vand.u32 %v599, 4294901760
        %601 = vmatpush.msra.mxu0 %v600
        %v602 = vand.u32 %v496, 4294901760
        %v603 = vsub.f32 %v496, %v602
        %v604 = vand.u32 %v603, 4294901760
        %v605 = vsub.f32 %v603, %v604
        %v606 = vand.u32 %v605, 4294901760
        %607 = vmatpush.msra.mxu0 %v606
        %v608 = vand.u32 %v492, 4294901760
        %v609 = vsub.f32 %v492, %v608
        %v610 = vand.u32 %v609, 4294901760
        %v611 = vsub.f32 %v609, %v610
        %v612 = vand.u32 %v611, 4294901760
        %613 = vmatpush.msra.mxu0 %v612
        %v614 = vand.u32 %v488, 4294901760
        %v615 = vsub.f32 %v488, %v614
        %v616 = vand.u32 %v615, 4294901760
        %v617 = vsub.f32 %v615, %v616
        %v618 = vand.u32 %v617, 4294901760
        %619 = vmatpush.msra.mxu0 %v618
        %v620 = vand.u32 %v484, 4294901760
        %v621 = vsub.f32 %v484, %v620
        %v622 = vand.u32 %v621, 4294901760
        %v623 = vsub.f32 %v621, %v622
        %v624 = vand.u32 %v623, 4294901760
        %625 = vmatpush.msra.mxu0 %v624
        %v626 = vand.u32 %v480, 4294901760
        %v627 = vsub.f32 %v480, %v626
        %v628 = vand.u32 %v627, 4294901760
        %v629 = vsub.f32 %v627, %v628
        %v630 = vand.u32 %v629, 4294901760
        %631 = vmatpush.msra.mxu0 %v630
        %v632 = vand.u32 %v514, 4294901760
        %633 = vmatmul.f32.gmra.mxu0 %v632
        %v634 = vpop.f32.mrf.mxu0
        %v635 = vadd.f32 %v555, %v634
        %v636 = vand.u32 %v517, 4294901760
        %637 = vmatmul.f32.gmra.mxu0 %v636
        %v638 = vpop.f32.mrf.mxu0
        %v639 = vadd.f32 %v563, %v638
        %v640 = vand.u32 %v520, 4294901760
        %641 = vmatmul.f32.gmra.mxu0 %v640
        %v642 = vpop.f32.mrf.mxu0
        %v643 = vadd.f32 %v571, %v642
        %v644 = vand.u32 %v523, 4294901760
        %645 = vmatmul.f32.gmra.mxu0 %v644
        %v646 = vpop.f32.mrf.mxu0
        %v647 = vadd.f32 %v579, %v646
        %648 = vdwg.mxu0
        %649 = vmatpush.msra.mxu0 0.0
        %650 = vmatpush.msra.mxu0 0.0
        %651 = vmatpush.msra.mxu0 0.0
        %652 = vmatpush.msra.mxu0 0.0
        %653 = vmatpush.msra.mxu0 0.0
        %654 = vmatpush.msra.mxu0 0.0
        %655 = vmatpush.msra.mxu0 0.0
        %656 = vmatpush.msra.mxu0 0.0
        %657 = vmatpush.msra.mxu0 0.0
        %v658 = vand.u32 %v504, 4294901760
        %v659 = vsub.f32 %v504, %v658
        %660 = vmatpush.msra.mxu0 %v659
        %v661 = vand.u32 %v500, 4294901760
        %v662 = vsub.f32 %v500, %v661
        %663 = vmatpush.msra.mxu0 %v662
        %v664 = vand.u32 %v496, 4294901760
        %v665 = vsub.f32 %v496, %v664
        %666 = vmatpush.msra.mxu0 %v665
        %v667 = vand.u32 %v492, 4294901760
        %v668 = vsub.f32 %v492, %v667
        %669 = vmatpush.msra.mxu0 %v668
        %v670 = vand.u32 %v488, 4294901760
        %v671 = vsub.f32 %v488, %v670
        %672 = vmatpush.msra.mxu0 %v671
        %v673 = vand.u32 %v484, 4294901760
        %v674 = vsub.f32 %v484, %v673
        %675 = vmatpush.msra.mxu0 %v674
        %v676 = vand.u32 %v480, 4294901760
        %v677 = vsub.f32 %v480, %v676
        %678 = vmatpush.msra.mxu0 %v677
        %v679 = vand.u32 %v514, 4294901760
        %v680 = vsub.f32 %v514, %v679
        %681 = vmatmul.f32.gmra.mxu0 %v680
        %v682 = vpop.f32.mrf.mxu0
        %v683 = vadd.f32 %v635, %v682
        %v684 = vand.u32 %v517, 4294901760
        %v685 = vsub.f32 %v517, %v684
        %686 = vmatmul.f32.gmra.mxu0 %v685
        %v687 = vpop.f32.mrf.mxu0
        %v688 = vadd.f32 %v639, %v687
        %v689 = vand.u32 %v520, 4294901760
        %v690 = vsub.f32 %v520, %v689
        %691 = vmatmul.f32.gmra.mxu0 %v690
        %v692 = vpop.f32.mrf.mxu0
        %v693 = vadd.f32 %v643, %v692
        %v694 = vand.u32 %v523, 4294901760
        %v695 = vsub.f32 %v523, %v694
        %696 = vmatmul.f32.gmra.mxu0 %v695
        %v697 = vpop.f32.mrf.mxu0
        %v698 = vadd.f32 %v647, %v697
        %699 = vdwg.mxu0
        %700 = vmatpush.msra.mxu0 0.0
        %701 = vmatpush.msra.mxu0 0.0
        %702 = vmatpush.msra.mxu0 0.0
        %703 = vmatpush.msra.mxu0 0.0
        %704 = vmatpush.msra.mxu0 0.0
        %705 = vmatpush.msra.mxu0 0.0
        %706 = vmatpush.msra.mxu0 0.0
        %707 = vmatpush.msra.mxu0 0.0
        %708 = vmatpush.msra.mxu0 0.0
        %v709 = vand.u32 %v504, 4294901760
        %710 = vmatpush.msra.mxu0 %v709
        %v711 = vand.u32 %v500, 4294901760
        %712 = vmatpush.msra.mxu0 %v711
        %v713 = vand.u32 %v496, 4294901760
        %714 = vmatpush.msra.mxu0 %v713
        %v715 = vand.u32 %v492, 4294901760
        %716 = vmatpush.msra.mxu0 %v715
        %v717 = vand.u32 %v488, 4294901760
        %718 = vmatpush.msra.mxu0 %v717
        %v719 = vand.u32 %v484, 4294901760
        %720 = vmatpush.msra.mxu0 %v719
        %v721 = vand.u32 %v480, 4294901760
        %722 = vmatpush.msra.mxu0 %v721
        %v723 = vand.u32 %v514, 4294901760
        %v724 = vsub.f32 %v514, %v723
        %v725 = vand.u32 %v724, 4294901760
        %726 = vmatmul.f32.gmra.mxu0 %v725
        %v727 = vpop.f32.mrf.mxu0
        %v728 = vadd.f32 %v683, %v727
        %v729 = vand.u32 %v517, 4294901760
        %v730 = vsub.f32 %v517, %v729
        %v731 = vand.u32 %v730, 4294901760
        %732 = vmatmul.f32.gmra.mxu0 %v731
        %v733 = vpop.f32.mrf.mxu0
        %v734 = vadd.f32 %v688, %v733
        %v735 = vand.u32 %v520, 4294901760
        %v736 = vsub.f32 %v520, %v735
        %v737 = vand.u32 %v736, 4294901760
        %738 = vmatmul.f32.gmra.mxu0 %v737
        %v739 = vpop.f32.mrf.mxu0
        %v740 = vadd.f32 %v693, %v739
        %v741 = vand.u32 %v523, 4294901760
        %v742 = vsub.f32 %v523, %v741
        %v743 = vand.u32 %v742, 4294901760
        %744 = vmatmul.f32.gmra.mxu0 %v743
        %v745 = vpop.f32.mrf.mxu0
        %v746 = vadd.f32 %v698, %v745
        %747 = vdwg.mxu0
        %748 = vmatpush.msra.mxu0 0.0
        %749 = vmatpush.msra.mxu0 0.0
        %750 = vmatpush.msra.mxu0 0.0
        %751 = vmatpush.msra.mxu0 0.0
        %752 = vmatpush.msra.mxu0 0.0
        %753 = vmatpush.msra.mxu0 0.0
        %754 = vmatpush.msra.mxu0 0.0
        %755 = vmatpush.msra.mxu0 0.0
        %756 = vmatpush.msra.mxu0 0.0
        %v757 = vand.u32 %v504, 4294901760
        %v758 = vsub.f32 %v504, %v757
        %v759 = vand.u32 %v758, 4294901760
        %760 = vmatpush.msra.mxu0 %v759
        %v761 = vand.u32 %v500, 4294901760
        %v762 = vsub.f32 %v500, %v761
        %v763 = vand.u32 %v762, 4294901760
        %764 = vmatpush.msra.mxu0 %v763
        %v765 = vand.u32 %v496, 4294901760
        %v766 = vsub.f32 %v496, %v765
        %v767 = vand.u32 %v766, 4294901760
        %768 = vmatpush.msra.mxu0 %v767
        %v769 = vand.u32 %v492, 4294901760
        %v770 = vsub.f32 %v492, %v769
        %v771 = vand.u32 %v770, 4294901760
        %772 = vmatpush.msra.mxu0 %v771
        %v773 = vand.u32 %v488, 4294901760
        %v774 = vsub.f32 %v488, %v773
        %v775 = vand.u32 %v774, 4294901760
        %776 = vmatpush.msra.mxu0 %v775
        %v777 = vand.u32 %v484, 4294901760
        %v778 = vsub.f32 %v484, %v777
        %v779 = vand.u32 %v778, 4294901760
        %780 = vmatpush.msra.mxu0 %v779
        %v781 = vand.u32 %v480, 4294901760
        %v782 = vsub.f32 %v480, %v781
        %v783 = vand.u32 %v782, 4294901760
        %784 = vmatpush.msra.mxu0 %v783
        %v785 = vand.u32 %v514, 4294901760
        %786 = vmatmul.f32.gmra.mxu0 %v785
        %v787 = vpop.f32.mrf.mxu0
        %v788 = vadd.f32 %v728, %v787
        %v789 = vand.u32 %v517, 4294901760
        %790 = vmatmul.f32.gmra.mxu0 %v789
        %v791 = vpop.f32.mrf.mxu0
        %v792 = vadd.f32 %v734, %v791
        %v793 = vand.u32 %v520, 4294901760
        %794 = vmatmul.f32.gmra.mxu0 %v793
        %v795 = vpop.f32.mrf.mxu0
        %v796 = vadd.f32 %v740, %v795
        %v797 = vand.u32 %v523, 4294901760
        %798 = vmatmul.f32.gmra.mxu0 %v797
        %v799 = vpop.f32.mrf.mxu0
        %v800 = vadd.f32 %v746, %v799
        %801 = vdwg.mxu0
        %802 = vmatpush.msra.mxu0 0.0
        %803 = vmatpush.msra.mxu0 0.0
        %804 = vmatpush.msra.mxu0 0.0
        %805 = vmatpush.msra.mxu0 0.0
        %806 = vmatpush.msra.mxu0 0.0
        %807 = vmatpush.msra.mxu0 0.0
        %808 = vmatpush.msra.mxu0 0.0
        %809 = vmatpush.msra.mxu0 0.0
        %810 = vmatpush.msra.mxu0 0.0
        %v811 = vand.u32 %v504, 4294901760
        %812 = vmatpush.msra.mxu0 %v811
        %v813 = vand.u32 %v500, 4294901760
        %814 = vmatpush.msra.mxu0 %v813
        %v815 = vand.u32 %v496, 4294901760
        %816 = vmatpush.msra.mxu0 %v815
        %v817 = vand.u32 %v492, 4294901760
        %818 = vmatpush.msra.mxu0 %v817
        %v819 = vand.u32 %v488, 4294901760
        %820 = vmatpush.msra.mxu0 %v819
        %v821 = vand.u32 %v484, 4294901760
        %822 = vmatpush.msra.mxu0 %v821
        %v823 = vand.u32 %v480, 4294901760
        %824 = vmatpush.msra.mxu0 %v823
        %v825 = vand.u32 %v514, 4294901760
        %826 = vmatmul.f32.gmra.mxu0 %v825
        %v827 = vpop.f32.mrf.mxu0
        %v828 = vadd.f32 %v788, %v827
        %v829 = vand.u32 %v517, 4294901760
        %830 = vmatmul.f32.gmra.mxu0 %v829
        %v831 = vpop.f32.mrf.mxu0
        %v832 = vadd.f32 %v792, %v831
        %v833 = vand.u32 %v520, 4294901760
        %834 = vmatmul.f32.gmra.mxu0 %v833
        %v835 = vpop.f32.mrf.mxu0
        %v836 = vadd.f32 %v796, %v835
        %v837 = vand.u32 %v523, 4294901760
        %838 = vmatmul.f32.gmra.mxu0 %v837
        %v839 = vpop.f32.mrf.mxu0
        %v840 = vadd.f32 %v800, %v839
        %841 = vdwg.mxu0
        %842 = vmatpush.msra.mxu0 0.0
        %843 = vmatpush.msra.mxu0 0.0
        %844 = vmatpush.msra.mxu0 0.0
        %845 = vmatpush.msra.mxu0 0.0
        %846 = vmatpush.msra.mxu0 0.0
        %847 = vmatpush.msra.mxu0 0.0
        %848 = vmatpush.msra.mxu0 0.0
        %849 = vmatpush.msra.mxu0 0.0
        %850 = vmatpush.msra.mxu0 0.0
        %v851 = vand.u32 %v505, 4294901760
        %852 = vmatpush.msra.mxu0 %v851
        %v853 = vand.u32 %v501, 4294901760
        %854 = vmatpush.msra.mxu0 %v853
        %v855 = vand.u32 %v497, 4294901760
        %856 = vmatpush.msra.mxu0 %v855
        %v857 = vand.u32 %v493, 4294901760
        %858 = vmatpush.msra.mxu0 %v857
        %v859 = vand.u32 %v489, 4294901760
        %860 = vmatpush.msra.mxu0 %v859
        %v861 = vand.u32 %v485, 4294901760
        %862 = vmatpush.msra.mxu0 %v861
        %v863 = vand.u32 %v481, 4294901760
        %864 = vmatpush.msra.mxu0 %v863
        %v865 = vand.u32 %v514, 4294901760
        %v866 = vsub.f32 %v514, %v865
        %v867 = vand.u32 %v866, 4294901760
        %v868 = vsub.f32 %v866, %v867
        %v869 = vand.u32 %v868, 4294901760
        %870 = vmatmul.f32.gmra.mxu0 %v869
        %v871 = vpop.f32.mrf.mxu0
        %v872 = vadd.f32 0.0, %v871
        %v873 = vand.u32 %v517, 4294901760
        %v874 = vsub.f32 %v517, %v873
        %v875 = vand.u32 %v874, 4294901760
        %v876 = vsub.f32 %v874, %v875
        %v877 = vand.u32 %v876, 4294901760
        %878 = vmatmul.f32.gmra.mxu0 %v877
        %v879 = vpop.f32.mrf.mxu0
        %v880 = vadd.f32 0.0, %v879
        %v881 = vand.u32 %v520, 4294901760
        %v882 = vsub.f32 %v520, %v881
        %v883 = vand.u32 %v882, 4294901760
        %v884 = vsub.f32 %v882, %v883
        %v885 = vand.u32 %v884, 4294901760
        %886 = vmatmul.f32.gmra.mxu0 %v885
        %v887 = vpop.f32.mrf.mxu0
        %v888 = vadd.f32 0.0, %v887
        %v889 = vand.u32 %v523, 4294901760
        %v890 = vsub.f32 %v523, %v889
        %v891 = vand.u32 %v890, 4294901760
        %v892 = vsub.f32 %v890, %v891
        %v893 = vand.u32 %v892, 4294901760
        %894 = vmatmul.f32.gmra.mxu0 %v893
        %v895 = vpop.f32.mrf.mxu0
        %v896 = vadd.f32 0.0, %v895
        %897 = vdwg.mxu0
        %898 = vmatpush.msra.mxu0 0.0
        %899 = vmatpush.msra.mxu0 0.0
        %900 = vmatpush.msra.mxu0 0.0
        %901 = vmatpush.msra.mxu0 0.0
        %902 = vmatpush.msra.mxu0 0.0
        %903 = vmatpush.msra.mxu0 0.0
        %904 = vmatpush.msra.mxu0 0.0
        %905 = vmatpush.msra.mxu0 0.0
        %906 = vmatpush.msra.mxu0 0.0
        %v907 = vand.u32 %v505, 4294901760
        %v908 = vsub.f32 %v505, %v907
        %v909 = vand.u32 %v908, 4294901760
        %v910 = vsub.f32 %v908, %v909
        %v911 = vand.u32 %v910, 4294901760
        %912 = vmatpush.msra.mxu0 %v911
        %v913 = vand.u32 %v501, 4294901760
        %v914 = vsub.f32 %v501, %v913
        %v915 = vand.u32 %v914, 4294901760
        %v916 = vsub.f32 %v914, %v915
        %v917 = vand.u32 %v916, 4294901760
        %918 = vmatpush.msra.mxu0 %v917
        %v919 = vand.u32 %v497, 4294901760
        %v920 = vsub.f32 %v497, %v919
        %v921 = vand.u32 %v920, 4294901760
        %v922 = vsub.f32 %v920, %v921
        %v923 = vand.u32 %v922, 4294901760
        %924 = vmatpush.msra.mxu0 %v923
        %v925 = vand.u32 %v493, 4294901760
        %v926 = vsub.f32 %v493, %v925
        %v927 = vand.u32 %v926, 4294901760
        %v928 = vsub.f32 %v926, %v927
        %v929 = vand.u32 %v928, 4294901760
        %930 = vmatpush.msra.mxu0 %v929
        %v931 = vand.u32 %v489, 4294901760
        %v932 = vsub.f32 %v489, %v931
        %v933 = vand.u32 %v932, 4294901760
        %v934 = vsub.f32 %v932, %v933
        %v935 = vand.u32 %v934, 4294901760
        %936 = vmatpush.msra.mxu0 %v935
        %v937 = vand.u32 %v485, 4294901760
        %v938 = vsub.f32 %v485, %v937
        %v939 = vand.u32 %v938, 4294901760
        %v940 = vsub.f32 %v938, %v939
        %v941 = vand.u32 %v940, 4294901760
        %942 = vmatpush.msra.mxu0 %v941
        %v943 = vand.u32 %v481, 4294901760
        %v944 = vsub.f32 %v481, %v943
        %v945 = vand.u32 %v944, 4294901760
        %v946 = vsub.f32 %v944, %v945
        %v947 = vand.u32 %v946, 4294901760
        %948 = vmatpush.msra.mxu0 %v947
        %v949 = vand.u32 %v514, 4294901760
        %950 = vmatmul.f32.gmra.mxu0 %v949
        %v951 = vpop.f32.mrf.mxu0
        %v952 = vadd.f32 %v872, %v951
        %v953 = vand.u32 %v517, 4294901760
        %954 = vmatmul.f32.gmra.mxu0 %v953
        %v955 = vpop.f32.mrf.mxu0
        %v956 = vadd.f32 %v880, %v955
        %v957 = vand.u32 %v520, 4294901760
        %958 = vmatmul.f32.gmra.mxu0 %v957
        %v959 = vpop.f32.mrf.mxu0
        %v960 = vadd.f32 %v888, %v959
        %v961 = vand.u32 %v523, 4294901760
        %962 = vmatmul.f32.gmra.mxu0 %v961
        %v963 = vpop.f32.mrf.mxu0
        %v964 = vadd.f32 %v896, %v963
        %965 = vdwg.mxu0
        %966 = vmatpush.msra.mxu0 0.0
        %967 = vmatpush.msra.mxu0 0.0
        %968 = vmatpush.msra.mxu0 0.0
        %969 = vmatpush.msra.mxu0 0.0
        %970 = vmatpush.msra.mxu0 0.0
        %971 = vmatpush.msra.mxu0 0.0
        %972 = vmatpush.msra.mxu0 0.0
        %973 = vmatpush.msra.mxu0 0.0
        %974 = vmatpush.msra.mxu0 0.0
        %v975 = vand.u32 %v505, 4294901760
        %v976 = vsub.f32 %v505, %v975
        %977 = vmatpush.msra.mxu0 %v976
        %v978 = vand.u32 %v501, 4294901760
        %v979 = vsub.f32 %v501, %v978
        %980 = vmatpush.msra.mxu0 %v979
        %v981 = vand.u32 %v497, 4294901760
        %v982 = vsub.f32 %v497, %v981
        %983 = vmatpush.msra.mxu0 %v982
        %v984 = vand.u32 %v493, 4294901760
        %v985 = vsub.f32 %v493, %v984
        %986 = vmatpush.msra.mxu0 %v985
        %v987 = vand.u32 %v489, 4294901760
        %v988 = vsub.f32 %v489, %v987
        %989 = vmatpush.msra.mxu0 %v988
        %v990 = vand.u32 %v485, 4294901760
        %v991 = vsub.f32 %v485, %v990
        %992 = vmatpush.msra.mxu0 %v991
        %v993 = vand.u32 %v481, 4294901760
        %v994 = vsub.f32 %v481, %v993
        %995 = vmatpush.msra.mxu0 %v994
        %v996 = vand.u32 %v514, 4294901760
        %v997 = vsub.f32 %v514, %v996
        %998 = vmatmul.f32.gmra.mxu0 %v997
        %v999 = vpop.f32.mrf.mxu0
        %v1000 = vadd.f32 %v952, %v999
        %v1001 = vand.u32 %v517, 4294901760
        %v1002 = vsub.f32 %v517, %v1001
        %1003 = vmatmul.f32.gmra.mxu0 %v1002
        %v1004 = vpop.f32.mrf.mxu0
        %v1005 = vadd.f32 %v956, %v1004
        %v1006 = vand.u32 %v520, 4294901760
        %v1007 = vsub.f32 %v520, %v1006
        %1008 = vmatmul.f32.gmra.mxu0 %v1007
        %v1009 = vpop.f32.mrf.mxu0
        %v1010 = vadd.f32 %v960, %v1009
        %v1011 = vand.u32 %v523, 4294901760
        %v1012 = vsub.f32 %v523, %v1011
        %1013 = vmatmul.f32.gmra.mxu0 %v1012
        %v1014 = vpop.f32.mrf.mxu0
        %v1015 = vadd.f32 %v964, %v1014
        %1016 = vdwg.mxu0
        %1017 = vmatpush.msra.mxu0 0.0
        %1018 = vmatpush.msra.mxu0 0.0
        %1019 = vmatpush.msra.mxu0 0.0
        %1020 = vmatpush.msra.mxu0 0.0
        %1021 = vmatpush.msra.mxu0 0.0
        %1022 = vmatpush.msra.mxu0 0.0
        %1023 = vmatpush.msra.mxu0 0.0
        %1024 = vmatpush.msra.mxu0 0.0
        %1025 = vmatpush.msra.mxu0 0.0
        %v1026 = vand.u32 %v505, 4294901760
        %1027 = vmatpush.msra.mxu0 %v1026
        %v1028 = vand.u32 %v501, 4294901760
        %1029 = vmatpush.msra.mxu0 %v1028
        %v1030 = vand.u32 %v497, 4294901760
        %1031 = vmatpush.msra.mxu0 %v1030
        %v1032 = vand.u32 %v493, 4294901760
        %1033 = vmatpush.msra.mxu0 %v1032
        %v1034 = vand.u32 %v489, 4294901760
        %1035 = vmatpush.msra.mxu0 %v1034
        %v1036 = vand.u32 %v485, 4294901760
        %1037 = vmatpush.msra.mxu0 %v1036
        %v1038 = vand.u32 %v481, 4294901760
        %1039 = vmatpush.msra.mxu0 %v1038
        %v1040 = vand.u32 %v514, 4294901760
        %v1041 = vsub.f32 %v514, %v1040
        %v1042 = vand.u32 %v1041, 4294901760
        %1043 = vmatmul.f32.gmra.mxu0 %v1042
        %v1044 = vpop.f32.mrf.mxu0
        %v1045 = vadd.f32 %v1000, %v1044
        %v1046 = vand.u32 %v517, 4294901760
        %v1047 = vsub.f32 %v517, %v1046
        %v1048 = vand.u32 %v1047, 4294901760
        %1049 = vmatmul.f32.gmra.mxu0 %v1048
        %v1050 = vpop.f32.mrf.mxu0
        %v1051 = vadd.f32 %v1005, %v1050
        %v1052 = vand.u32 %v520, 4294901760
        %v1053 = vsub.f32 %v520, %v1052
        %v1054 = vand.u32 %v1053, 4294901760
        %1055 = vmatmul.f32.gmra.mxu0 %v1054
        %v1056 = vpop.f32.mrf.mxu0
        %v1057 = vadd.f32 %v1010, %v1056
        %v1058 = vand.u32 %v523, 4294901760
        %v1059 = vsub.f32 %v523, %v1058
        %v1060 = vand.u32 %v1059, 4294901760
        %1061 = vmatmul.f32.gmra.mxu0 %v1060
        %v1062 = vpop.f32.mrf.mxu0
        %v1063 = vadd.f32 %v1015, %v1062
        %1064 = vdwg.mxu0
        %1065 = vmatpush.msra.mxu0 0.0
        %1066 = vmatpush.msra.mxu0 0.0
        %1067 = vmatpush.msra.mxu0 0.0
        %1068 = vmatpush.msra.mxu0 0.0
        %1069 = vmatpush.msra.mxu0 0.0
        %1070 = vmatpush.msra.mxu0 0.0
        %1071 = vmatpush.msra.mxu0 0.0
        %1072 = vmatpush.msra.mxu0 0.0
        %1073 = vmatpush.msra.mxu0 0.0
        %v1074 = vand.u32 %v505, 4294901760
        %v1075 = vsub.f32 %v505, %v1074
        %v1076 = vand.u32 %v1075, 4294901760
        %1077 = vmatpush.msra.mxu0 %v1076
        %v1078 = vand.u32 %v501, 4294901760
        %v1079 = vsub.f32 %v501, %v1078
        %v1080 = vand.u32 %v1079, 4294901760
        %1081 = vmatpush.msra.mxu0 %v1080
        %v1082 = vand.u32 %v497, 4294901760
        %v1083 = vsub.f32 %v497, %v1082
        %v1084 = vand.u32 %v1083, 4294901760
        %1085 = vmatpush.msra.mxu0 %v1084
        %v1086 = vand.u32 %v493, 4294901760
        %v1087 = vsub.f32 %v493, %v1086
        %v1088 = vand.u32 %v1087, 4294901760
        %1089 = vmatpush.msra.mxu0 %v1088
        %v1090 = vand.u32 %v489, 4294901760
        %v1091 = vsub.f32 %v489, %v1090
        %v1092 = vand.u32 %v1091, 4294901760
        %1093 = vmatpush.msra.mxu0 %v1092
        %v1094 = vand.u32 %v485, 4294901760
        %v1095 = vsub.f32 %v485, %v1094
        %v1096 = vand.u32 %v1095, 4294901760
        %1097 = vmatpush.msra.mxu0 %v1096
        %v1098 = vand.u32 %v481, 4294901760
        %v1099 = vsub.f32 %v481, %v1098
        %v1100 = vand.u32 %v1099, 4294901760
        %1101 = vmatpush.msra.mxu0 %v1100
        %v1102 = vand.u32 %v514, 4294901760
        %1103 = vmatmul.f32.gmra.mxu0 %v1102
        %v1104 = vpop.f32.mrf.mxu0
        %v1105 = vadd.f32 %v1045, %v1104
        %v1106 = vand.u32 %v517, 4294901760
        %1107 = vmatmul.f32.gmra.mxu0 %v1106
        %v1108 = vpop.f32.mrf.mxu0
        %v1109 = vadd.f32 %v1051, %v1108
        %v1110 = vand.u32 %v520, 4294901760
        %1111 = vmatmul.f32.gmra.mxu0 %v1110
        %v1112 = vpop.f32.mrf.mxu0
        %v1113 = vadd.f32 %v1057, %v1112
        %v1114 = vand.u32 %v523, 4294901760
        %1115 = vmatmul.f32.gmra.mxu0 %v1114
        %v1116 = vpop.f32.mrf.mxu0
        %v1117 = vadd.f32 %v1063, %v1116
        %1118 = vdwg.mxu0
        %1119 = vmatpush.msra.mxu0 0.0
        %1120 = vmatpush.msra.mxu0 0.0
        %1121 = vmatpush.msra.mxu0 0.0
        %1122 = vmatpush.msra.mxu0 0.0
        %1123 = vmatpush.msra.mxu0 0.0
        %1124 = vmatpush.msra.mxu0 0.0
        %1125 = vmatpush.msra.mxu0 0.0
        %1126 = vmatpush.msra.mxu0 0.0
        %1127 = vmatpush.msra.mxu0 0.0
        %v1128 = vand.u32 %v505, 4294901760
        %1129 = vmatpush.msra.mxu0 %v1128
        %v1130 = vand.u32 %v501, 4294901760
        %1131 = vmatpush.msra.mxu0 %v1130
        %v1132 = vand.u32 %v497, 4294901760
        %1133 = vmatpush.msra.mxu0 %v1132
        %v1134 = vand.u32 %v493, 4294901760
        %1135 = vmatpush.msra.mxu0 %v1134
        %v1136 = vand.u32 %v489, 4294901760
        %1137 = vmatpush.msra.mxu0 %v1136
        %v1138 = vand.u32 %v485, 4294901760
        %1139 = vmatpush.msra.mxu0 %v1138
        %v1140 = vand.u32 %v481, 4294901760
        %1141 = vmatpush.msra.mxu0 %v1140
        %v1142 = vand.u32 %v514, 4294901760
        %1143 = vmatmul.f32.gmra.mxu0 %v1142
        %v1144 = vpop.f32.mrf.mxu0
        %v1145 = vadd.f32 %v1105, %v1144
        %v1146 = vand.u32 %v517, 4294901760
        %1147 = vmatmul.f32.gmra.mxu0 %v1146
        %v1148 = vpop.f32.mrf.mxu0
        %v1149 = vadd.f32 %v1109, %v1148
        %v1150 = vand.u32 %v520, 4294901760
        %1151 = vmatmul.f32.gmra.mxu0 %v1150
        %v1152 = vpop.f32.mrf.mxu0
        %v1153 = vadd.f32 %v1113, %v1152
        %v1154 = vand.u32 %v523, 4294901760
        %1155 = vmatmul.f32.gmra.mxu0 %v1154
        %v1156 = vpop.f32.mrf.mxu0
        %v1157 = vadd.f32 %v1117, %v1156
        %1158 = vdwg.mxu0
        %1159 = vmatpush.msra.mxu0 0.0
        %1160 = vmatpush.msra.mxu0 0.0
        %1161 = vmatpush.msra.mxu0 0.0
        %1162 = vmatpush.msra.mxu0 0.0
        %1163 = vmatpush.msra.mxu0 0.0
        %1164 = vmatpush.msra.mxu0 0.0
        %1165 = vmatpush.msra.mxu0 0.0
        %1166 = vmatpush.msra.mxu0 0.0
        %1167 = vmatpush.msra.mxu0 0.0
        %v1168 = vand.u32 %v506, 4294901760
        %1169 = vmatpush.msra.mxu0 %v1168
        %v1170 = vand.u32 %v502, 4294901760
        %1171 = vmatpush.msra.mxu0 %v1170
        %v1172 = vand.u32 %v498, 4294901760
        %1173 = vmatpush.msra.mxu0 %v1172
        %v1174 = vand.u32 %v494, 4294901760
        %1175 = vmatpush.msra.mxu0 %v1174
        %v1176 = vand.u32 %v490, 4294901760
        %1177 = vmatpush.msra.mxu0 %v1176
        %v1178 = vand.u32 %v486, 4294901760
        %1179 = vmatpush.msra.mxu0 %v1178
        %v1180 = vand.u32 %v482, 4294901760
        %1181 = vmatpush.msra.mxu0 %v1180
        %v1182 = vand.u32 %v514, 4294901760
        %v1183 = vsub.f32 %v514, %v1182
        %v1184 = vand.u32 %v1183, 4294901760
        %v1185 = vsub.f32 %v1183, %v1184
        %v1186 = vand.u32 %v1185, 4294901760
        %1187 = vmatmul.f32.gmra.mxu0 %v1186
        %v1188 = vpop.f32.mrf.mxu0
        %v1189 = vadd.f32 0.0, %v1188
        %v1190 = vand.u32 %v517, 4294901760
        %v1191 = vsub.f32 %v517, %v1190
        %v1192 = vand.u32 %v1191, 4294901760
        %v1193 = vsub.f32 %v1191, %v1192
        %v1194 = vand.u32 %v1193, 4294901760
        %1195 = vmatmul.f32.gmra.mxu0 %v1194
        %v1196 = vpop.f32.mrf.mxu0
        %v1197 = vadd.f32 0.0, %v1196
        %v1198 = vand.u32 %v520, 4294901760
        %v1199 = vsub.f32 %v520, %v1198
        %v1200 = vand.u32 %v1199, 4294901760
        %v1201 = vsub.f32 %v1199, %v1200
        %v1202 = vand.u32 %v1201, 4294901760
        %1203 = vmatmul.f32.gmra.mxu0 %v1202
        %v1204 = vpop.f32.mrf.mxu0
        %v1205 = vadd.f32 0.0, %v1204
        %v1206 = vand.u32 %v523, 4294901760
        %v1207 = vsub.f32 %v523, %v1206
        %v1208 = vand.u32 %v1207, 4294901760
        %v1209 = vsub.f32 %v1207, %v1208
        %v1210 = vand.u32 %v1209, 4294901760
        %1211 = vmatmul.f32.gmra.mxu0 %v1210
        %v1212 = vpop.f32.mrf.mxu0
        %v1213 = vadd.f32 0.0, %v1212
        %1214 = vdwg.mxu0
        %1215 = vmatpush.msra.mxu0 0.0
        %1216 = vmatpush.msra.mxu0 0.0
        %1217 = vmatpush.msra.mxu0 0.0
        %1218 = vmatpush.msra.mxu0 0.0
        %1219 = vmatpush.msra.mxu0 0.0
        %1220 = vmatpush.msra.mxu0 0.0
        %1221 = vmatpush.msra.mxu0 0.0
        %1222 = vmatpush.msra.mxu0 0.0
        %1223 = vmatpush.msra.mxu0 0.0
        %v1224 = vand.u32 %v506, 4294901760
        %v1225 = vsub.f32 %v506, %v1224
        %v1226 = vand.u32 %v1225, 4294901760
        %v1227 = vsub.f32 %v1225, %v1226
        %v1228 = vand.u32 %v1227, 4294901760
        %1229 = vmatpush.msra.mxu0 %v1228
        %v1230 = vand.u32 %v502, 4294901760
        %v1231 = vsub.f32 %v502, %v1230
        %v1232 = vand.u32 %v1231, 4294901760
        %v1233 = vsub.f32 %v1231, %v1232
        %v1234 = vand.u32 %v1233, 4294901760
        %1235 = vmatpush.msra.mxu0 %v1234
        %v1236 = vand.u32 %v498, 4294901760
        %v1237 = vsub.f32 %v498, %v1236
        %v1238 = vand.u32 %v1237, 4294901760
        %v1239 = vsub.f32 %v1237, %v1238
        %v1240 = vand.u32 %v1239, 4294901760
        %1241 = vmatpush.msra.mxu0 %v1240
        %v1242 = vand.u32 %v494, 4294901760
        %v1243 = vsub.f32 %v494, %v1242
        %v1244 = vand.u32 %v1243, 4294901760
        %v1245 = vsub.f32 %v1243, %v1244
        %v1246 = vand.u32 %v1245, 4294901760
        %1247 = vmatpush.msra.mxu0 %v1246
        %v1248 = vand.u32 %v490, 4294901760
        %v1249 = vsub.f32 %v490, %v1248
        %v1250 = vand.u32 %v1249, 4294901760
        %v1251 = vsub.f32 %v1249, %v1250
        %v1252 = vand.u32 %v1251, 4294901760
        %1253 = vmatpush.msra.mxu0 %v1252
        %v1254 = vand.u32 %v486, 4294901760
        %v1255 = vsub.f32 %v486, %v1254
        %v1256 = vand.u32 %v1255, 4294901760
        %v1257 = vsub.f32 %v1255, %v1256
        %v1258 = vand.u32 %v1257, 4294901760
        %1259 = vmatpush.msra.mxu0 %v1258
        %v1260 = vand.u32 %v482, 4294901760
        %v1261 = vsub.f32 %v482, %v1260
        %v1262 = vand.u32 %v1261, 4294901760
        %v1263 = vsub.f32 %v1261, %v1262
        %v1264 = vand.u32 %v1263, 4294901760
        %1265 = vmatpush.msra.mxu0 %v1264
        %v1266 = vand.u32 %v514, 4294901760
        %1267 = vmatmul.f32.gmra.mxu0 %v1266
        %v1268 = vpop.f32.mrf.mxu0
        %v1269 = vadd.f32 %v1189, %v1268
        %v1270 = vand.u32 %v517, 4294901760
        %1271 = vmatmul.f32.gmra.mxu0 %v1270
        %v1272 = vpop.f32.mrf.mxu0
        %v1273 = vadd.f32 %v1197, %v1272
        %v1274 = vand.u32 %v520, 4294901760
        %1275 = vmatmul.f32.gmra.mxu0 %v1274
        %v1276 = vpop.f32.mrf.mxu0
        %v1277 = vadd.f32 %v1205, %v1276
        %v1278 = vand.u32 %v523, 4294901760
        %1279 = vmatmul.f32.gmra.mxu0 %v1278
        %v1280 = vpop.f32.mrf.mxu0
        %v1281 = vadd.f32 %v1213, %v1280
        %1282 = vdwg.mxu0
        %1283 = vmatpush.msra.mxu0 0.0
        %1284 = vmatpush.msra.mxu0 0.0
        %1285 = vmatpush.msra.mxu0 0.0
        %1286 = vmatpush.msra.mxu0 0.0
        %1287 = vmatpush.msra.mxu0 0.0
        %1288 = vmatpush.msra.mxu0 0.0
        %1289 = vmatpush.msra.mxu0 0.0
        %1290 = vmatpush.msra.mxu0 0.0
        %1291 = vmatpush.msra.mxu0 0.0
        %v1292 = vand.u32 %v506, 4294901760
        %v1293 = vsub.f32 %v506, %v1292
        %1294 = vmatpush.msra.mxu0 %v1293
        %v1295 = vand.u32 %v502, 4294901760
        %v1296 = vsub.f32 %v502, %v1295
        %1297 = vmatpush.msra.mxu0 %v1296
        %v1298 = vand.u32 %v498, 4294901760
        %v1299 = vsub.f32 %v498, %v1298
        %1300 = vmatpush.msra.mxu0 %v1299
        %v1301 = vand.u32 %v494, 4294901760
        %v1302 = vsub.f32 %v494, %v1301
        %1303 = vmatpush.msra.mxu0 %v1302
        %v1304 = vand.u32 %v490, 4294901760
        %v1305 = vsub.f32 %v490, %v1304
        %1306 = vmatpush.msra.mxu0 %v1305
        %v1307 = vand.u32 %v486, 4294901760
        %v1308 = vsub.f32 %v486, %v1307
        %1309 = vmatpush.msra.mxu0 %v1308
        %v1310 = vand.u32 %v482, 4294901760
        %v1311 = vsub.f32 %v482, %v1310
        %1312 = vmatpush.msra.mxu0 %v1311
        %v1313 = vand.u32 %v514, 4294901760
        %v1314 = vsub.f32 %v514, %v1313
        %1315 = vmatmul.f32.gmra.mxu0 %v1314
        %v1316 = vpop.f32.mrf.mxu0
        %v1317 = vadd.f32 %v1269, %v1316
        %v1318 = vand.u32 %v517, 4294901760
        %v1319 = vsub.f32 %v517, %v1318
        %1320 = vmatmul.f32.gmra.mxu0 %v1319
        %v1321 = vpop.f32.mrf.mxu0
        %v1322 = vadd.f32 %v1273, %v1321
        %v1323 = vand.u32 %v520, 4294901760
        %v1324 = vsub.f32 %v520, %v1323
        %1325 = vmatmul.f32.gmra.mxu0 %v1324
        %v1326 = vpop.f32.mrf.mxu0
        %v1327 = vadd.f32 %v1277, %v1326
        %v1328 = vand.u32 %v523, 4294901760
        %v1329 = vsub.f32 %v523, %v1328
        %1330 = vmatmul.f32.gmra.mxu0 %v1329
        %v1331 = vpop.f32.mrf.mxu0
        %v1332 = vadd.f32 %v1281, %v1331
        %1333 = vdwg.mxu0
        %1334 = vmatpush.msra.mxu0 0.0
        %1335 = vmatpush.msra.mxu0 0.0
        %1336 = vmatpush.msra.mxu0 0.0
        %1337 = vmatpush.msra.mxu0 0.0
        %1338 = vmatpush.msra.mxu0 0.0
        %1339 = vmatpush.msra.mxu0 0.0
        %1340 = vmatpush.msra.mxu0 0.0
        %1341 = vmatpush.msra.mxu0 0.0
        %1342 = vmatpush.msra.mxu0 0.0
        %v1343 = vand.u32 %v506, 4294901760
        %1344 = vmatpush.msra.mxu0 %v1343
        %v1345 = vand.u32 %v502, 4294901760
        %1346 = vmatpush.msra.mxu0 %v1345
        %v1347 = vand.u32 %v498, 4294901760
        %1348 = vmatpush.msra.mxu0 %v1347
        %v1349 = vand.u32 %v494, 4294901760
        %1350 = vmatpush.msra.mxu0 %v1349
        %v1351 = vand.u32 %v490, 4294901760
        %1352 = vmatpush.msra.mxu0 %v1351
        %v1353 = vand.u32 %v486, 4294901760
        %1354 = vmatpush.msra.mxu0 %v1353
        %v1355 = vand.u32 %v482, 4294901760
        %1356 = vmatpush.msra.mxu0 %v1355
        %v1357 = vand.u32 %v514, 4294901760
        %v1358 = vsub.f32 %v514, %v1357
        %v1359 = vand.u32 %v1358, 4294901760
        %1360 = vmatmul.f32.gmra.mxu0 %v1359
        %v1361 = vpop.f32.mrf.mxu0
        %v1362 = vadd.f32 %v1317, %v1361
        %v1363 = vand.u32 %v517, 4294901760
        %v1364 = vsub.f32 %v517, %v1363
        %v1365 = vand.u32 %v1364, 4294901760
        %1366 = vmatmul.f32.gmra.mxu0 %v1365
        %v1367 = vpop.f32.mrf.mxu0
        %v1368 = vadd.f32 %v1322, %v1367
        %v1369 = vand.u32 %v520, 4294901760
        %v1370 = vsub.f32 %v520, %v1369
        %v1371 = vand.u32 %v1370, 4294901760
        %1372 = vmatmul.f32.gmra.mxu0 %v1371
        %v1373 = vpop.f32.mrf.mxu0
        %v1374 = vadd.f32 %v1327, %v1373
        %v1375 = vand.u32 %v523, 4294901760
        %v1376 = vsub.f32 %v523, %v1375
        %v1377 = vand.u32 %v1376, 4294901760
        %1378 = vmatmul.f32.gmra.mxu0 %v1377
        %v1379 = vpop.f32.mrf.mxu0
        %v1380 = vadd.f32 %v1332, %v1379
        %1381 = vdwg.mxu0
        %1382 = vmatpush.msra.mxu0 0.0
        %1383 = vmatpush.msra.mxu0 0.0
        %1384 = vmatpush.msra.mxu0 0.0
        %1385 = vmatpush.msra.mxu0 0.0
        %1386 = vmatpush.msra.mxu0 0.0
        %1387 = vmatpush.msra.mxu0 0.0
        %1388 = vmatpush.msra.mxu0 0.0
        %1389 = vmatpush.msra.mxu0 0.0
        %1390 = vmatpush.msra.mxu0 0.0
        %v1391 = vand.u32 %v506, 4294901760
        %v1392 = vsub.f32 %v506, %v1391
        %v1393 = vand.u32 %v1392, 4294901760
        %1394 = vmatpush.msra.mxu0 %v1393
        %v1395 = vand.u32 %v502, 4294901760
        %v1396 = vsub.f32 %v502, %v1395
        %v1397 = vand.u32 %v1396, 4294901760
        %1398 = vmatpush.msra.mxu0 %v1397
        %v1399 = vand.u32 %v498, 4294901760
        %v1400 = vsub.f32 %v498, %v1399
        %v1401 = vand.u32 %v1400, 4294901760
        %1402 = vmatpush.msra.mxu0 %v1401
        %v1403 = vand.u32 %v494, 4294901760
        %v1404 = vsub.f32 %v494, %v1403
        %v1405 = vand.u32 %v1404, 4294901760
        %1406 = vmatpush.msra.mxu0 %v1405
        %v1407 = vand.u32 %v490, 4294901760
        %v1408 = vsub.f32 %v490, %v1407
        %v1409 = vand.u32 %v1408, 4294901760
        %1410 = vmatpush.msra.mxu0 %v1409
        %v1411 = vand.u32 %v486, 4294901760
        %v1412 = vsub.f32 %v486, %v1411
        %v1413 = vand.u32 %v1412, 4294901760
        %1414 = vmatpush.msra.mxu0 %v1413
        %v1415 = vand.u32 %v482, 4294901760
        %v1416 = vsub.f32 %v482, %v1415
        %v1417 = vand.u32 %v1416, 4294901760
        %1418 = vmatpush.msra.mxu0 %v1417
        %v1419 = vand.u32 %v514, 4294901760
        %1420 = vmatmul.f32.gmra.mxu0 %v1419
        %v1421 = vpop.f32.mrf.mxu0
        %v1422 = vadd.f32 %v1362, %v1421
        %v1423 = vand.u32 %v517, 4294901760
        %1424 = vmatmul.f32.gmra.mxu0 %v1423
        %v1425 = vpop.f32.mrf.mxu0
        %v1426 = vadd.f32 %v1368, %v1425
        %v1427 = vand.u32 %v520, 4294901760
        %1428 = vmatmul.f32.gmra.mxu0 %v1427
        %v1429 = vpop.f32.mrf.mxu0
        %v1430 = vadd.f32 %v1374, %v1429
        %v1431 = vand.u32 %v523, 4294901760
        %1432 = vmatmul.f32.gmra.mxu0 %v1431
        %v1433 = vpop.f32.mrf.mxu0
        %v1434 = vadd.f32 %v1380, %v1433
        %1435 = vdwg.mxu0
        %1436 = vmatpush.msra.mxu0 0.0
        %1437 = vmatpush.msra.mxu0 0.0
        %1438 = vmatpush.msra.mxu0 0.0
        %1439 = vmatpush.msra.mxu0 0.0
        %1440 = vmatpush.msra.mxu0 0.0
        %1441 = vmatpush.msra.mxu0 0.0
        %1442 = vmatpush.msra.mxu0 0.0
        %1443 = vmatpush.msra.mxu0 0.0
        %1444 = vmatpush.msra.mxu0 0.0
        %v1445 = vand.u32 %v506, 4294901760
        %1446 = vmatpush.msra.mxu0 %v1445
        %v1447 = vand.u32 %v502, 4294901760
        %1448 = vmatpush.msra.mxu0 %v1447
        %v1449 = vand.u32 %v498, 4294901760
        %1450 = vmatpush.msra.mxu0 %v1449
        %v1451 = vand.u32 %v494, 4294901760
        %1452 = vmatpush.msra.mxu0 %v1451
        %v1453 = vand.u32 %v490, 4294901760
        %1454 = vmatpush.msra.mxu0 %v1453
        %v1455 = vand.u32 %v486, 4294901760
        %1456 = vmatpush.msra.mxu0 %v1455
        %v1457 = vand.u32 %v482, 4294901760
        %1458 = vmatpush.msra.mxu0 %v1457
        %v1459 = vand.u32 %v514, 4294901760
        %1460 = vmatmul.f32.gmra.mxu0 %v1459
        %v1461 = vpop.f32.mrf.mxu0
        %v1462 = vadd.f32 %v1422, %v1461
        %v1463 = vand.u32 %v517, 4294901760
        %1464 = vmatmul.f32.gmra.mxu0 %v1463
        %v1465 = vpop.f32.mrf.mxu0
        %v1466 = vadd.f32 %v1426, %v1465
        %v1467 = vand.u32 %v520, 4294901760
        %1468 = vmatmul.f32.gmra.mxu0 %v1467
        %v1469 = vpop.f32.mrf.mxu0
        %v1470 = vadd.f32 %v1430, %v1469
        %v1471 = vand.u32 %v523, 4294901760
        %1472 = vmatmul.f32.gmra.mxu0 %v1471
        %v1473 = vpop.f32.mrf.mxu0
        %v1474 = vadd.f32 %v1434, %v1473
        %1475 = vdwg.mxu0
        %1476 = vmatpush.msra.mxu0 0.0
        %1477 = vmatpush.msra.mxu0 0.0
        %1478 = vmatpush.msra.mxu0 0.0
        %1479 = vmatpush.msra.mxu0 0.0
        %1480 = vmatpush.msra.mxu0 0.0
        %1481 = vmatpush.msra.mxu0 0.0
        %1482 = vmatpush.msra.mxu0 0.0
        %1483 = vmatpush.msra.mxu0 0.0
        %1484 = vmatpush.msra.mxu0 0.0
        %v1485 = vand.u32 %v507, 4294901760
        %1486 = vmatpush.msra.mxu0 %v1485
        %v1487 = vand.u32 %v503, 4294901760
        %1488 = vmatpush.msra.mxu0 %v1487
        %v1489 = vand.u32 %v499, 4294901760
        %1490 = vmatpush.msra.mxu0 %v1489
        %v1491 = vand.u32 %v495, 4294901760
        %1492 = vmatpush.msra.mxu0 %v1491
        %v1493 = vand.u32 %v491, 4294901760
        %1494 = vmatpush.msra.mxu0 %v1493
        %v1495 = vand.u32 %v487, 4294901760
        %1496 = vmatpush.msra.mxu0 %v1495
        %v1497 = vand.u32 %v483, 4294901760
        %1498 = vmatpush.msra.mxu0 %v1497
        %v1499 = vand.u32 %v514, 4294901760
        %v1500 = vsub.f32 %v514, %v1499
        %v1501 = vand.u32 %v1500, 4294901760
        %v1502 = vsub.f32 %v1500, %v1501
        %v1503 = vand.u32 %v1502, 4294901760
        %1504 = vmatmul.f32.gmra.mxu0 %v1503
        %v1505 = vpop.f32.mrf.mxu0
        %v1506 = vadd.f32 0.0, %v1505
        %v1507 = vand.u32 %v517, 4294901760
        %v1508 = vsub.f32 %v517, %v1507
        %v1509 = vand.u32 %v1508, 4294901760
        %v1510 = vsub.f32 %v1508, %v1509
        %v1511 = vand.u32 %v1510, 4294901760
        %1512 = vmatmul.f32.gmra.mxu0 %v1511
        %v1513 = vpop.f32.mrf.mxu0
        %v1514 = vadd.f32 0.0, %v1513
        %v1515 = vand.u32 %v520, 4294901760
        %v1516 = vsub.f32 %v520, %v1515
        %v1517 = vand.u32 %v1516, 4294901760
        %v1518 = vsub.f32 %v1516, %v1517
        %v1519 = vand.u32 %v1518, 4294901760
        %1520 = vmatmul.f32.gmra.mxu0 %v1519
        %v1521 = vpop.f32.mrf.mxu0
        %v1522 = vadd.f32 0.0, %v1521
        %v1523 = vand.u32 %v523, 4294901760
        %v1524 = vsub.f32 %v523, %v1523
        %v1525 = vand.u32 %v1524, 4294901760
        %v1526 = vsub.f32 %v1524, %v1525
        %v1527 = vand.u32 %v1526, 4294901760
        %1528 = vmatmul.f32.gmra.mxu0 %v1527
        %v1529 = vpop.f32.mrf.mxu0
        %v1530 = vadd.f32 0.0, %v1529
        %1531 = vdwg.mxu0
        %1532 = vmatpush.msra.mxu0 0.0
        %1533 = vmatpush.msra.mxu0 0.0
        %1534 = vmatpush.msra.mxu0 0.0
        %1535 = vmatpush.msra.mxu0 0.0
        %1536 = vmatpush.msra.mxu0 0.0
        %1537 = vmatpush.msra.mxu0 0.0
        %1538 = vmatpush.msra.mxu0 0.0
        %1539 = vmatpush.msra.mxu0 0.0
        %1540 = vmatpush.msra.mxu0 0.0
        %v1541 = vand.u32 %v507, 4294901760
        %v1542 = vsub.f32 %v507, %v1541
        %v1543 = vand.u32 %v1542, 4294901760
        %v1544 = vsub.f32 %v1542, %v1543
        %v1545 = vand.u32 %v1544, 4294901760
        %1546 = vmatpush.msra.mxu0 %v1545
        %v1547 = vand.u32 %v503, 4294901760
        %v1548 = vsub.f32 %v503, %v1547
        %v1549 = vand.u32 %v1548, 4294901760
        %v1550 = vsub.f32 %v1548, %v1549
        %v1551 = vand.u32 %v1550, 4294901760
        %1552 = vmatpush.msra.mxu0 %v1551
        %v1553 = vand.u32 %v499, 4294901760
        %v1554 = vsub.f32 %v499, %v1553
        %v1555 = vand.u32 %v1554, 4294901760
        %v1556 = vsub.f32 %v1554, %v1555
        %v1557 = vand.u32 %v1556, 4294901760
        %1558 = vmatpush.msra.mxu0 %v1557
        %v1559 = vand.u32 %v495, 4294901760
        %v1560 = vsub.f32 %v495, %v1559
        %v1561 = vand.u32 %v1560, 4294901760
        %v1562 = vsub.f32 %v1560, %v1561
        %v1563 = vand.u32 %v1562, 4294901760
        %1564 = vmatpush.msra.mxu0 %v1563
        %v1565 = vand.u32 %v491, 4294901760
        %v1566 = vsub.f32 %v491, %v1565
        %v1567 = vand.u32 %v1566, 4294901760
        %v1568 = vsub.f32 %v1566, %v1567
        %v1569 = vand.u32 %v1568, 4294901760
        %1570 = vmatpush.msra.mxu0 %v1569
        %v1571 = vand.u32 %v487, 4294901760
        %v1572 = vsub.f32 %v487, %v1571
        %v1573 = vand.u32 %v1572, 4294901760
        %v1574 = vsub.f32 %v1572, %v1573
        %v1575 = vand.u32 %v1574, 4294901760
        %1576 = vmatpush.msra.mxu0 %v1575
        %v1577 = vand.u32 %v483, 4294901760
        %v1578 = vsub.f32 %v483, %v1577
        %v1579 = vand.u32 %v1578, 4294901760
        %v1580 = vsub.f32 %v1578, %v1579
        %v1581 = vand.u32 %v1580, 4294901760
        %1582 = vmatpush.msra.mxu0 %v1581
        %v1583 = vand.u32 %v514, 4294901760
        %1584 = vmatmul.f32.gmra.mxu0 %v1583
        %v1585 = vpop.f32.mrf.mxu0
        %v1586 = vadd.f32 %v1506, %v1585
        %v1587 = vand.u32 %v517, 4294901760
        %1588 = vmatmul.f32.gmra.mxu0 %v1587
        %v1589 = vpop.f32.mrf.mxu0
        %v1590 = vadd.f32 %v1514, %v1589
        %v1591 = vand.u32 %v520, 4294901760
        %1592 = vmatmul.f32.gmra.mxu0 %v1591
        %v1593 = vpop.f32.mrf.mxu0
        %v1594 = vadd.f32 %v1522, %v1593
        %v1595 = vand.u32 %v523, 4294901760
        %1596 = vmatmul.f32.gmra.mxu0 %v1595
        %v1597 = vpop.f32.mrf.mxu0
        %v1598 = vadd.f32 %v1530, %v1597
        %1599 = vdwg.mxu0
        %1600 = vmatpush.msra.mxu0 0.0
        %1601 = vmatpush.msra.mxu0 0.0
        %1602 = vmatpush.msra.mxu0 0.0
        %1603 = vmatpush.msra.mxu0 0.0
        %1604 = vmatpush.msra.mxu0 0.0
        %1605 = vmatpush.msra.mxu0 0.0
        %1606 = vmatpush.msra.mxu0 0.0
        %1607 = vmatpush.msra.mxu0 0.0
        %1608 = vmatpush.msra.mxu0 0.0
        %v1609 = vand.u32 %v507, 4294901760
        %v1610 = vsub.f32 %v507, %v1609
        %1611 = vmatpush.msra.mxu0 %v1610
        %v1612 = vand.u32 %v503, 4294901760
        %v1613 = vsub.f32 %v503, %v1612
        %1614 = vmatpush.msra.mxu0 %v1613
        %v1615 = vand.u32 %v499, 4294901760
        %v1616 = vsub.f32 %v499, %v1615
        %1617 = vmatpush.msra.mxu0 %v1616
        %v1618 = vand.u32 %v495, 4294901760
        %v1619 = vsub.f32 %v495, %v1618
        %1620 = vmatpush.msra.mxu0 %v1619
        %v1621 = vand.u32 %v491, 4294901760
        %v1622 = vsub.f32 %v491, %v1621
        %1623 = vmatpush.msra.mxu0 %v1622
        %v1624 = vand.u32 %v487, 4294901760
        %v1625 = vsub.f32 %v487, %v1624
        %1626 = vmatpush.msra.mxu0 %v1625
        %v1627 = vand.u32 %v483, 4294901760
        %v1628 = vsub.f32 %v483, %v1627
        %1629 = vmatpush.msra.mxu0 %v1628
        %v1630 = vand.u32 %v514, 4294901760
        %v1631 = vsub.f32 %v514, %v1630
        %1632 = vmatmul.f32.gmra.mxu0 %v1631
        %v1633 = vpop.f32.mrf.mxu0
        %v1634 = vadd.f32 %v1586, %v1633
        %v1635 = vand.u32 %v517, 4294901760
        %v1636 = vsub.f32 %v517, %v1635
        %1637 = vmatmul.f32.gmra.mxu0 %v1636
        %v1638 = vpop.f32.mrf.mxu0
        %v1639 = vadd.f32 %v1590, %v1638
        %v1640 = vand.u32 %v520, 4294901760
        %v1641 = vsub.f32 %v520, %v1640
        %1642 = vmatmul.f32.gmra.mxu0 %v1641
        %v1643 = vpop.f32.mrf.mxu0
        %v1644 = vadd.f32 %v1594, %v1643
        %v1645 = vand.u32 %v523, 4294901760
        %v1646 = vsub.f32 %v523, %v1645
        %1647 = vmatmul.f32.gmra.mxu0 %v1646
        %v1648 = vpop.f32.mrf.mxu0
        %v1649 = vadd.f32 %v1598, %v1648
        %1650 = vdwg.mxu0
        %1651 = vmatpush.msra.mxu0 0.0
        %1652 = vmatpush.msra.mxu0 0.0
        %1653 = vmatpush.msra.mxu0 0.0
        %1654 = vmatpush.msra.mxu0 0.0
        %1655 = vmatpush.msra.mxu0 0.0
        %1656 = vmatpush.msra.mxu0 0.0
        %1657 = vmatpush.msra.mxu0 0.0
        %1658 = vmatpush.msra.mxu0 0.0
        %1659 = vmatpush.msra.mxu0 0.0
        %v1660 = vand.u32 %v507, 4294901760
        %1661 = vmatpush.msra.mxu0 %v1660
        %v1662 = vand.u32 %v503, 4294901760
        %1663 = vmatpush.msra.mxu0 %v1662
        %v1664 = vand.u32 %v499, 4294901760
        %1665 = vmatpush.msra.mxu0 %v1664
        %v1666 = vand.u32 %v495, 4294901760
        %1667 = vmatpush.msra.mxu0 %v1666
        %v1668 = vand.u32 %v491, 4294901760
        %1669 = vmatpush.msra.mxu0 %v1668
        %v1670 = vand.u32 %v487, 4294901760
        %1671 = vmatpush.msra.mxu0 %v1670
        %v1672 = vand.u32 %v483, 4294901760
        %1673 = vmatpush.msra.mxu0 %v1672
        %v1674 = vand.u32 %v514, 4294901760
        %v1675 = vsub.f32 %v514, %v1674
        %v1676 = vand.u32 %v1675, 4294901760
        %1677 = vmatmul.f32.gmra.mxu0 %v1676
        %v1678 = vpop.f32.mrf.mxu0
        %v1679 = vadd.f32 %v1634, %v1678
        %v1680 = vand.u32 %v517, 4294901760
        %v1681 = vsub.f32 %v517, %v1680
        %v1682 = vand.u32 %v1681, 4294901760
        %1683 = vmatmul.f32.gmra.mxu0 %v1682
        %v1684 = vpop.f32.mrf.mxu0
        %v1685 = vadd.f32 %v1639, %v1684
        %v1686 = vand.u32 %v520, 4294901760
        %v1687 = vsub.f32 %v520, %v1686
        %v1688 = vand.u32 %v1687, 4294901760
        %1689 = vmatmul.f32.gmra.mxu0 %v1688
        %v1690 = vpop.f32.mrf.mxu0
        %v1691 = vadd.f32 %v1644, %v1690
        %v1692 = vand.u32 %v523, 4294901760
        %v1693 = vsub.f32 %v523, %v1692
        %v1694 = vand.u32 %v1693, 4294901760
        %1695 = vmatmul.f32.gmra.mxu0 %v1694
        %v1696 = vpop.f32.mrf.mxu0
        %v1697 = vadd.f32 %v1649, %v1696
        %1698 = vdwg.mxu0
        %1699 = vmatpush.msra.mxu0 0.0
        %1700 = vmatpush.msra.mxu0 0.0
        %1701 = vmatpush.msra.mxu0 0.0
        %1702 = vmatpush.msra.mxu0 0.0
        %1703 = vmatpush.msra.mxu0 0.0
        %1704 = vmatpush.msra.mxu0 0.0
        %1705 = vmatpush.msra.mxu0 0.0
        %1706 = vmatpush.msra.mxu0 0.0
        %1707 = vmatpush.msra.mxu0 0.0
        %v1708 = vand.u32 %v507, 4294901760
        %v1709 = vsub.f32 %v507, %v1708
        %v1710 = vand.u32 %v1709, 4294901760
        %1711 = vmatpush.msra.mxu0 %v1710
        %v1712 = vand.u32 %v503, 4294901760
        %v1713 = vsub.f32 %v503, %v1712
        %v1714 = vand.u32 %v1713, 4294901760
        %1715 = vmatpush.msra.mxu0 %v1714
        %v1716 = vand.u32 %v499, 4294901760
        %v1717 = vsub.f32 %v499, %v1716
        %v1718 = vand.u32 %v1717, 4294901760
        %1719 = vmatpush.msra.mxu0 %v1718
        %v1720 = vand.u32 %v495, 4294901760
        %v1721 = vsub.f32 %v495, %v1720
        %v1722 = vand.u32 %v1721, 4294901760
        %1723 = vmatpush.msra.mxu0 %v1722
        %v1724 = vand.u32 %v491, 4294901760
        %v1725 = vsub.f32 %v491, %v1724
        %v1726 = vand.u32 %v1725, 4294901760
        %1727 = vmatpush.msra.mxu0 %v1726
        %v1728 = vand.u32 %v487, 4294901760
        %v1729 = vsub.f32 %v487, %v1728
        %v1730 = vand.u32 %v1729, 4294901760
        %1731 = vmatpush.msra.mxu0 %v1730
        %v1732 = vand.u32 %v483, 4294901760
        %v1733 = vsub.f32 %v483, %v1732
        %v1734 = vand.u32 %v1733, 4294901760
        %1735 = vmatpush.msra.mxu0 %v1734
        %v1736 = vand.u32 %v514, 4294901760
        %1737 = vmatmul.f32.gmra.mxu0 %v1736
        %v1738 = vpop.f32.mrf.mxu0
        %v1739 = vadd.f32 %v1679, %v1738
        %v1740 = vand.u32 %v517, 4294901760
        %1741 = vmatmul.f32.gmra.mxu0 %v1740
        %v1742 = vpop.f32.mrf.mxu0
        %v1743 = vadd.f32 %v1685, %v1742
        %v1744 = vand.u32 %v520, 4294901760
        %1745 = vmatmul.f32.gmra.mxu0 %v1744
        %v1746 = vpop.f32.mrf.mxu0
        %v1747 = vadd.f32 %v1691, %v1746
        %v1748 = vand.u32 %v523, 4294901760
        %1749 = vmatmul.f32.gmra.mxu0 %v1748
        %v1750 = vpop.f32.mrf.mxu0
        %v1751 = vadd.f32 %v1697, %v1750
        %1752 = vdwg.mxu0
        %1753 = vmatpush.msra.mxu0 0.0
        %1754 = vmatpush.msra.mxu0 0.0
        %1755 = vmatpush.msra.mxu0 0.0
        %1756 = vmatpush.msra.mxu0 0.0
        %1757 = vmatpush.msra.mxu0 0.0
        %1758 = vmatpush.msra.mxu0 0.0
        %1759 = vmatpush.msra.mxu0 0.0
        %1760 = vmatpush.msra.mxu0 0.0
        %1761 = vmatpush.msra.mxu0 0.0
        %v1762 = vand.u32 %v507, 4294901760
        %1763 = vmatpush.msra.mxu0 %v1762
        %v1764 = vand.u32 %v503, 4294901760
        %1765 = vmatpush.msra.mxu0 %v1764
        %v1766 = vand.u32 %v499, 4294901760
        %1767 = vmatpush.msra.mxu0 %v1766
        %v1768 = vand.u32 %v495, 4294901760
        %1769 = vmatpush.msra.mxu0 %v1768
        %v1770 = vand.u32 %v491, 4294901760
        %1771 = vmatpush.msra.mxu0 %v1770
        %v1772 = vand.u32 %v487, 4294901760
        %1773 = vmatpush.msra.mxu0 %v1772
        %v1774 = vand.u32 %v483, 4294901760
        %1775 = vmatpush.msra.mxu0 %v1774
        %v1776 = vand.u32 %v514, 4294901760
        %1777 = vmatmul.f32.gmra.mxu0 %v1776
        %v1778 = vpop.f32.mrf.mxu0
        %v1779 = vadd.f32 %v1739, %v1778
        %v1780 = vand.u32 %v517, 4294901760
        %1781 = vmatmul.f32.gmra.mxu0 %v1780
        %v1782 = vpop.f32.mrf.mxu0
        %v1783 = vadd.f32 %v1743, %v1782
        %v1784 = vand.u32 %v520, 4294901760
        %1785 = vmatmul.f32.gmra.mxu0 %v1784
        %v1786 = vpop.f32.mrf.mxu0
        %v1787 = vadd.f32 %v1747, %v1786
        %v1788 = vand.u32 %v523, 4294901760
        %1789 = vmatmul.f32.gmra.mxu0 %v1788
        %v1790 = vpop.f32.mrf.mxu0
        %v1791 = vadd.f32 %v1751, %v1790
        %1792 = vdwg.mxu0
        %v1793 = vmul.f32 %v828, 0.5
        %v1794 = vmul.f32 %v1145, 0.5
        %v1795 = vmul.f32 %v1462, 0.5
        %v1796 = vmul.f32 %v1779, 0.5
        %v1797 = vmul.f32 %v832, 0.5
        %v1798 = vmul.f32 %v1149, 0.5
        %v1799 = vmul.f32 %v1466, 0.5
        %v1800 = vmul.f32 %v1783, 0.5
        %v1801 = vmul.f32 %v1793, %v828
        %v1802 = vmul.f32 %v1794, %v1145
        %v1803 = vmul.f32 %v1795, %v1462
        %v1804 = vmul.f32 %v1796, %v1779
        %v1805 = vmul.f32 %v1797, %v832
        %v1806 = vmul.f32 %v1798, %v1149
        %v1807 = vmul.f32 %v1799, %v1466
        %v1808 = vmul.f32 %v1800, %v1783
        %v1809 = vadd.f32 %v1801, %v836
        %v1810 = vadd.f32 %v1802, %v1153
        %v1811 = vadd.f32 %v1803, %v1470
        %v1812 = vadd.f32 %v1804, %v1787
        %v1813 = vadd.f32 %v1805, %v840
        %v1814 = vadd.f32 %v1806, %v1157
        %v1815 = vadd.f32 %v1807, %v1474
        %v1816 = vadd.f32 %v1808, %v1791
        %1817 = vst [vmem:[%s133] sm:$0xff] %v1809
        %1818 = vst [vmem:[%s133 + $0x8] sm:$0xff] %v1810
        %1819 = vst [vmem:[%s133 + $0x10] sm:$0xff] %v1811
        %1820 = vst [vmem:[%s133 + $0x18] sm:$0xff] %v1812
        %1821 = vst [vmem:[%s133 + $0x20] sm:$0xff] %v1813
        %1822 = vst [vmem:[%s133 + $0x28] sm:$0xff] %v1814
        %1823 = vst [vmem:[%s133 + $0x30] sm:$0xff] %v1815
        %1824 = vst [vmem:[%s133 + $0x38] sm:$0xff] %v1816
        %s1825 = sand.u32 %s68, 1
        %s1826 = sand.u32 %s68, 1
        %s1827 = smul.addr %s1826, 64
        %s1828 = scalar_lea.vmem [#allocation2], %s1827
        // Predicated region
        $region29: #{fm_forward.1} parent=27 // pred_check
          %p1829 = pneg %p78
        $region30: #{fm_forward.1} parent=27 // pred_check_branch
          %1831 = sbr.rel (%p1829) target = $region32
        $region31: #{fm_forward.1} parent=27 // pred_region
          %s1832 = smul.u32 4, %s13
          %s1833 = smul.addr %s1832, 8
          %s1834 = scalar_lea.vmem %s2, %s1833
          // Predicated region
          $region33: #{fm_forward.1} parent=31 // pred_check
            _
          $region34: #{fm_forward.1} parent=31 // pred_check_branch
            %1836 = sbr.rel (0) target = $region36
          $region35: #{fm_forward.1} parent=31 // pred_region
            // Predicated region
            $region37: #{fm_forward.1} parent=35 // pred_check
              _
            $region38: #{fm_forward.1} parent=35 // pred_check_branch
              %1838 = sbr.rel (0) target = $region40
            $region39: #{fm_forward.1} parent=35 // pred_region
              loop: start=0, step=1, limit=1
              $region41: #{fm_forward.1} parent=39 // loop_pre_header
                _
              $region42: #{fm_forward.1} parent=39 // loop_header
                %s1840 = sphi 0, %s1844
                %p1841 = scmp.ge.s32.totalorder %s1840, 1
                %s1845 = sphi %s1828, %s1828
                %s1846 = sphi %s1834, %s1834
              $region43: #{fm_forward.1} parent=39 // loop_header_branch
                %1843 = sbr.rel (%p1841) target = $region47
              $region44: #{fm_forward.1} parent=39 // loop_body
                %v1847 = vld [vmem:[%s1845] sm:$0xff]
                %1848 = vst [vmem:[%s1846] sm:$0xff] %v1847
                %v1849 = vld [vmem:[%s1845 + $0x8] sm:$0xff]
                %1850 = vst [vmem:[%s1846 + $0x8] sm:$0xff] %v1849
                %v1851 = vld [vmem:[%s1845 + $0x10] sm:$0xff]
                %1852 = vst [vmem:[%s1846 + $0x10] sm:$0xff] %v1851
                %v1853 = vld [vmem:[%s1845 + $0x18] sm:$0xff]
                %1854 = vst [vmem:[%s1846 + $0x18] sm:$0xff] %v1853
                %v1855 = vld [vmem:[%s1845 + $0x20] sm:$0xff]
                %1856 = vst [vmem:[%s1846 + $0x40] sm:$0xff] %v1855
                %v1857 = vld [vmem:[%s1845 + $0x28] sm:$0xff]
                %1858 = vst [vmem:[%s1846 + $0x48] sm:$0xff] %v1857
                %v1859 = vld [vmem:[%s1845 + $0x30] sm:$0xff]
                %1860 = vst [vmem:[%s1846 + $0x50] sm:$0xff] %v1859
                %v1861 = vld [vmem:[%s1845 + $0x38] sm:$0xff]
                %1862 = vst [vmem:[%s1846 + $0x58] sm:$0xff] %v1861
              $region45: #{fm_forward.1} parent=39 // loop_footer
                %s1844 = sadd.s32 1, %s1840
              $region46: #{fm_forward.1} parent=39 // loop_footer_branch
                %1839 = sbr.rel target = $region42
              $region47: #{fm_forward.1} parent=39 // loop_exit
                _
            $region40: #{fm_forward.1} parent=35 // pred_fallthru
              _
            // Predicated region
            $region48: #{fm_forward.1} parent=35 // pred_check
              _
            $region49: #{fm_forward.1} parent=35 // pred_check_branch
              %1864 = sbr.rel target = $region51
            $region50: #{fm_forward.1} parent=35 // pred_region
              _
            $region51: #{fm_forward.1} parent=35 // pred_fallthru
              _
          $region36: #{fm_forward.1} parent=31 // pred_fallthru
            _
          %1865 = vnop
        $region32: #{fm_forward.1} parent=27 // pred_fallthru
          _
      $region28: #{fm_forward.1} parent=5 // pred_fallthru
        _
      %p1866 = scmp.le.s32.totalorder 2, %s8
      // Predicated region
      $region52: #{fm_forward.1} parent=5 // pred_check
        %p1867 = pneg %p1866
      $region53: #{fm_forward.1} parent=5 // pred_check_branch
        %1869 = sbr.rel (%p1867) target = $region55
      $region54: #{fm_forward.1} parent=5 // pred_region
        %s1870 = ssub.s32 %s8, 2
        // Predicated region
        $region56: #{fm_forward.1} parent=54 // pred_check
          %p1871 = pneg %p84
        $region57: #{fm_forward.1} parent=54 // pred_check_branch
          %1873 = sbr.rel (%p1871) target = $region59
        $region58: #{fm_forward.1} parent=54 // pred_region
          %s1874 = sand.u32 %s69, 1
          %s1875 = sand.u32 %s69, 1
          %s1876 = smul.addr %s1875, 64
          %s1877 = scalar_lea.vmem [#allocation2], %s1876
        $region59: #{fm_forward.1} parent=54 // pred_fallthru
          _
      $region55: #{fm_forward.1} parent=5 // pred_fallthru
        _
    $region6: #{fm_forward.1} parent=1 // loop_footer
      %s12 = sadd.s32 1, %s8
    $region7: #{fm_forward.1} parent=1 // loop_footer_branch
      %7 = sbr.rel target = $region3
    $region8: #{fm_forward.1} parent=1 // loop_exit
      _

</llo_original>
